<compile_context>
chip_gen: v5e
topology: v5e:2x2
jax: 0.10.0
libtpu: 0.0.40
codegen_flags: <defaults>
</compile_context>

<pallas_src>
import functools

import jax
import jax.numpy as jnp
from jax.experimental import pallas as pl
from jax.experimental.pallas import tpu as pltpu

EMB = 25
HID = 32
PAD = 4 * HID  # 128-lane padded gate width


def idraggn_kernel(tok_ref,    # (S*B,) int32, SMEM (flattened tokens)
                   proj_ref,   # (V, 128) f32, VMEM (embed@w_ih0 + b_ih0, padded 96->128)
                   slab_ref,   # (152, 128) f32, VMEM (packed weights/biases)
                   out_ref,    # (B, out_size) f32
                   *, seq_len, batch):
    S, B, H, P = seq_len, batch, HID, PAD

    # ---- one-time loads from the packed weight slab (static, tile-aligned slices) ----
    whh0 = slab_ref[0:H, :]              # (32, 128) layer-0 hidden weights (padded)
    w1t = slab_ref[H:2 * H, :]           # (32, 128) layer-1 block, h0 half
    w1b = slab_ref[2 * H:3 * H, :]       # (32, 128) layer-1 block, h1 half
    wfc = slab_ref[3 * H:4 * H, :]       # (32, 128) fc weight (padded)
    # Bias broadcasts hoisted above the (unrolled) time loop -- JAX does not CSE them.
    bhh0 = jnp.broadcast_to(slab_ref[4 * H:4 * H + 1, :], (B, P))
    b1 = jnp.broadcast_to(slab_ref[4 * H + 8:4 * H + 9, :], (B, P))
    bfc = slab_ref[4 * H + 16:4 * H + 17, :]   # (1, 128)

    # ---- token gather hoisted above the recurrence (depends only on tokens) ----
    gi0 = []
    for t in range(S):
        rows = [proj_ref[pl.ds(tok_ref[t * B + b], 1), :] for b in range(B)]
        gi0.append(jnp.concatenate(rows, axis=0))        # (B, 128), lanes 96:128 == 0

    h0 = jnp.zeros((B, H), jnp.float32)
    h1 = jnp.zeros((B, H), jnp.float32)

    for t in range(S):  # static unroll (S is small and known at trace time)
        # ---- layer 0: input gates come pre-projected from the table ----
        gh0 = jnp.dot(h0, whh0, preferred_element_type=jnp.float32) + bhh0   # (B, 128)
        pre0 = gi0[t] + gh0
        r0 = jax.nn.sigmoid(pre0[:, 0:H])
        z0 = jax.nn.sigmoid(pre0[:, H:2 * H])
        n0 = jnp.tanh(gi0[t][:, 2 * H:3 * H] + r0 * gh0[:, 2 * H:3 * H])
        h0 = (1.0 - z0) * n0 + z0 * h0

        # ---- layer 1: split matmuls (no per-step lane concat on the dependency chain)
        g1 = (jnp.dot(h0, w1t, preferred_element_type=jnp.float32)
              + jnp.dot(h1, w1b, preferred_element_type=jnp.float32) + b1)   # (B, 128)
        r1 = jax.nn.sigmoid(g1[:, 0:H])
        z1 = jax.nn.sigmoid(g1[:, H:2 * H])
        n1 = jnp.tanh(g1[:, 2 * H:3 * H] + r1 * g1[:, 3 * H:4 * H])
        h1 = (1.0 - z1) * n1 + z1 * h1

    # ---- fc + relu on the last layer's final hidden state (== hid1[-1] in torch) ----
    logits = jnp.dot(h1, wfc, preferred_element_type=jnp.float32) + bfc      # (B, 128)
    out_ref[...] = jnp.maximum(logits, 0.0)[:, :out_ref.shape[1]]


def _prepare_kernel_params(params):
    """One-time (off the recurrence critical path) weight re-packing."""
    H, P = HID, PAD

    # Projected embedding table: fold w_ih0 and b_ih0, zero-pad 3H=96 -> 128 lanes.
    proj0 = jnp.dot(params["embed"], params["w_ih0"],
                    precision=jax.lax.Precision.HIGHEST) + params["b_ih0"]    # (V, 96)
    proj0 = jnp.pad(proj0, ((0, 0), (0, P - 3 * H)))                          # (V, 128)

    # Layer-0 hidden weights/bias padded to 128 columns (lane-dense vregs in-kernel).
    whh0 = jnp.pad(params["w_hh0"], ((0, 0), (0, P - 3 * H)))                 # (H, 128)
    bhh0 = jnp.pad(params["b_hh0"], ((0, 0), (0, P - 3 * H)))                 # (1, 128)

    # Layer-1 fused block weight, split into h0 / h1 halves:
    #   h0 @ w1_top + h1 @ w1_bot = [gi_r+gh_r, gi_z+gh_z, gi_n, gh_n] (pre-bias)
    wih1, whh1 = params["w_ih1"], params["w_hh1"]
    zeros = jnp.zeros((H, H), jnp.float32)
    w1_top = jnp.concatenate([wih1[:, :2 * H], wih1[:, 2 * H:], zeros], axis=1)  # (H,128)
    w1_bot = jnp.concatenate([whh1[:, :2 * H], zeros, whh1[:, 2 * H:]], axis=1)  # (H,128)
    bih1, bhh1 = params["b_ih1"], params["b_hh1"]
    b1 = jnp.concatenate([bih1[:, :2 * H] + bhh1[:, :2 * H],
                          bih1[:, 2 * H:], bhh1[:, 2 * H:]], axis=1)             # (1,128)

    # fc weight/bias padded to 128 output lanes.
    out_size = params["w_fc"].shape[1]
    wfc = jnp.pad(params["w_fc"], ((0, 0), (0, P - out_size)))                # (H, 128)
    bfc = jnp.pad(params["b_fc"], ((0, 0), (0, P - out_size)))                # (1, 128)

    # Pack the six small operands into one (152, 128) slab -> a single HBM->VMEM DMA.
    # Rows: whh0 0:32 | w1_top 32:64 | w1_bot 64:96 | wfc 96:128
    #       bhh0 @128 | b1 @136 | bfc @144  (each bias in its own 8-row aligned block)
    def bias_block(b):
        return jnp.pad(b, ((0, 7), (0, 0)))
    slab = jnp.concatenate(
        [whh0, w1_top, w1_bot, wfc, bias_block(bhh0), bias_block(b1), bias_block(bfc)],
        axis=0)                                                               # (152, 128)
    return proj0, slab


def idraggn_forward(tokens, params):
    """tokens: (S, B) int32. Returns (B, out_size) float32 (eval-mode forward)."""
    S, B = tokens.shape
    V = params["embed"].shape[0]
    out_size = params["w_fc"].shape[1]

    proj0, slab = _prepare_kernel_params(params)
    # Flatten tokens to 1D for SMEM and clamp (VMEM gathers have no runtime OOB check).
    tok_flat = jnp.clip(tokens.reshape(-1), 0, V - 1).astype(jnp.int32)

    smem = pl.BlockSpec(memory_space=pltpu.MemorySpace.SMEM)
    vmem = pl.BlockSpec(memory_space=pltpu.MemorySpace.VMEM)
    kernel = functools.partial(idraggn_kernel, seq_len=S, batch=B)
    return pl.pallas_call(
        kernel,
        out_shape=jax.ShapeDtypeStruct((B, out_size), jnp.float32),
        in_specs=[smem, vmem, vmem],
        out_specs=vmem,
    )(tok_flat, proj0, slab)


def init_params(key, vocab_size, out_size):
    """Deterministic init; GRU/Linear weights are stored pre-transposed (in, out)."""
    ks = jax.random.split(key, 12)
    u = lambda k, shape, bound: jax.random.uniform(
        k, shape, jnp.float32, minval=-bound, maxval=bound)
    bh = 1.0 / jnp.sqrt(HID)
    return {
        "embed": jax.random.normal(ks[0], (vocab_size, EMB), jnp.float32),
        # layer 0: input EMB -> hidden HID
        "w_ih0": u(ks[1], (EMB, 3 * HID), bh),
        "w_hh0": u(ks[2], (HID, 3 * HID), bh),
        "b_ih0": u(ks[3], (1, 3 * HID), bh),
        "b_hh0": u(ks[4], (1, 3 * HID), bh),
        # layer 1: input HID -> hidden HID
        "w_ih1": u(ks[5], (HID, 3 * HID), bh),
        "w_hh1": u(ks[6], (HID, 3 * HID), bh),
        "b_ih1": u(ks[7], (1, 3 * HID), bh),
        "b_hh1": u(ks[8], (1, 3 * HID), bh),
        # fc: HID -> out_size
        "w_fc": u(ks[9], (HID, out_size), bh),
        "b_fc": u(ks[10], (1, out_size), bh),
    }


def _gru_cell_ref(x, h, wih, whh, bih, bhh):
    """Reference PyTorch-convention GRU cell (gate order [r, z, n]), full precision."""
    H = HID
    gi = jnp.dot(x, wih, precision=jax.lax.Precision.HIGHEST) + bih
    gh = jnp.dot(h, whh, precision=jax.lax.Precision.HIGHEST) + bhh
    r = jax.nn.sigmoid(gi[:, 0:H] + gh[:, 0:H])
    z = jax.nn.sigmoid(gi[:, H:2 * H] + gh[:, H:2 * H])
    n = jnp.tanh(gi[:, 2 * H:] + r * gh[:, 2 * H:])
    return (1.0 - z) * n + z * h


def idraggn_reference(tokens, params):
    """Pure-JAX golden reference mirroring torch semantics (eval mode)."""
    emb = jnp.take(params["embed"], tokens, axis=0)
    S, B, _ = emb.shape
    h0 = jnp.zeros((B, HID), jnp.float32)
    h1 = jnp.zeros((B, HID), jnp.float32)
    for t in range(S):
        h0 = _gru_cell_ref(emb[t], h0, params["w_ih0"], params["w_hh0"],
                           params["b_ih0"], params["b_hh0"])
        h1 = _gru_cell_ref(h0, h1, params["w_ih1"], params["w_hh1"],
                           params["b_ih1"], params["b_hh1"])
    logits = jnp.dot(h1, params["w_fc"],
                     precision=jax.lax.Precision.HIGHEST) + params["b_fc"]
    return jnp.maximum(logits, 0.0)


if __name__ == "__main__":
    vocab_size = 50
    out_size = 8
    seq_len = 8
    batch = 2

    key = jax.random.PRNGKey(0)
    pkey, tkey = jax.random.split(key)
    params = init_params(pkey, vocab_size, out_size)
    tokens = jax.random.randint(tkey, (seq_len, batch), 0, vocab_size, jnp.int32)

    out = jax.jit(idraggn_forward)(tokens, params)
    out = jax.block_until_ready(out)

    ref = idraggn_reference(tokens, params)
    assert out.shape == (batch, out_size)
    # Kernel recurrence uses single-pass (bf16) MXU matmuls (perf guidance); tolerance
    # reflects bf16 rounding accumulated over 8 recurrent steps vs. the full-precision
    # golden reference.
    assert jnp.allclose(out, ref, atol=1e-2, rtol=1e-2), (out, ref)

    print("KERNEL_OK")
</pallas_src>

<mosaic_0001>
module attributes {stable_mosaic.version = 11 : i64} {
  func.func @idraggn_kernel(%arg0: memref<16xi32, #tpu.memory_space<smem>>, %arg1: memref<50x128xf32, #tpu.memory_space<vmem>>, %arg2: memref<152x128xf32, #tpu.memory_space<vmem>>, %arg3: memref<2x8xf32, #tpu.memory_space<vmem>>) attributes {dimension_semantics = [], scalar_prefetch = 0 : i64, scratch_operands = 0 : i64, tpu.core_type = #tpu.core_type<tc>} {
    %c0 = arith.constant 0 : index
    %c0_0 = arith.constant 0 : index
    %0 = vector.load %arg2[%c0, %c0_0] : memref<152x128xf32, #tpu.memory_space<vmem>>, vector<32x128xf32>
    %c32 = arith.constant 32 : index
    %c0_1 = arith.constant 0 : index
    %1 = vector.load %arg2[%c32, %c0_1] : memref<152x128xf32, #tpu.memory_space<vmem>>, vector<32x128xf32>
    %c64 = arith.constant 64 : index
    %c0_2 = arith.constant 0 : index
    %2 = vector.load %arg2[%c64, %c0_2] : memref<152x128xf32, #tpu.memory_space<vmem>>, vector<32x128xf32>
    %c96 = arith.constant 96 : index
    %c0_3 = arith.constant 0 : index
    %3 = vector.load %arg2[%c96, %c0_3] : memref<152x128xf32, #tpu.memory_space<vmem>>, vector<32x128xf32>
    %c128 = arith.constant 128 : index
    %c0_4 = arith.constant 0 : index
    %4 = vector.load %arg2[%c128, %c0_4] : memref<152x128xf32, #tpu.memory_space<vmem>>, vector<1x128xf32>
    %5 = vector.shape_cast %4 : vector<1x128xf32> to vector<1x128xf32>
    %6 = vector.broadcast %5 : vector<1x128xf32> to vector<2x128xf32>
    %c136 = arith.constant 136 : index
    %c0_5 = arith.constant 0 : index
    %7 = vector.load %arg2[%c136, %c0_5] : memref<152x128xf32, #tpu.memory_space<vmem>>, vector<1x128xf32>
    %8 = vector.shape_cast %7 : vector<1x128xf32> to vector<1x128xf32>
    %9 = vector.broadcast %8 : vector<1x128xf32> to vector<2x128xf32>
    %c144 = arith.constant 144 : index
    %c0_6 = arith.constant 0 : index
    %10 = vector.load %arg2[%c144, %c0_6] : memref<152x128xf32, #tpu.memory_space<vmem>>, vector<1x128xf32>
    %c0_7 = arith.constant 0 : index
    %11 = memref.load %arg0[%c0_7] : memref<16xi32, #tpu.memory_space<smem>>
    %12 = arith.index_cast %11 : i32 to index
    %c0_8 = arith.constant 0 : index
    %13 = vector.load %arg1[%12, %c0_8] : memref<50x128xf32, #tpu.memory_space<vmem>>, vector<1x128xf32>
    %c1 = arith.constant 1 : index
    %14 = memref.load %arg0[%c1] : memref<16xi32, #tpu.memory_space<smem>>
    %15 = arith.index_cast %14 : i32 to index
    %c0_9 = arith.constant 0 : index
    %16 = vector.load %arg1[%15, %c0_9] : memref<50x128xf32, #tpu.memory_space<vmem>>, vector<1x128xf32>
    %17 = tpu.concatenate %13, %16 in 0 : vector<1x128xf32>, vector<1x128xf32> -> vector<2x128xf32>
    %c2 = arith.constant 2 : index
    %18 = memref.load %arg0[%c2] : memref<16xi32, #tpu.memory_space<smem>>
    %19 = arith.index_cast %18 : i32 to index
    %c0_10 = arith.constant 0 : index
    %20 = vector.load %arg1[%19, %c0_10] : memref<50x128xf32, #tpu.memory_space<vmem>>, vector<1x128xf32>
    %c3 = arith.constant 3 : index
    %21 = memref.load %arg0[%c3] : memref<16xi32, #tpu.memory_space<smem>>
    %22 = arith.index_cast %21 : i32 to index
    %c0_11 = arith.constant 0 : index
    %23 = vector.load %arg1[%22, %c0_11] : memref<50x128xf32, #tpu.memory_space<vmem>>, vector<1x128xf32>
    %24 = tpu.concatenate %20, %23 in 0 : vector<1x128xf32>, vector<1x128xf32> -> vector<2x128xf32>
    %c4 = arith.constant 4 : index
    %25 = memref.load %arg0[%c4] : memref<16xi32, #tpu.memory_space<smem>>
    %26 = arith.index_cast %25 : i32 to index
    %c0_12 = arith.constant 0 : index
    %27 = vector.load %arg1[%26, %c0_12] : memref<50x128xf32, #tpu.memory_space<vmem>>, vector<1x128xf32>
    %c5 = arith.constant 5 : index
    %28 = memref.load %arg0[%c5] : memref<16xi32, #tpu.memory_space<smem>>
    %29 = arith.index_cast %28 : i32 to index
    %c0_13 = arith.constant 0 : index
    %30 = vector.load %arg1[%29, %c0_13] : memref<50x128xf32, #tpu.memory_space<vmem>>, vector<1x128xf32>
    %31 = tpu.concatenate %27, %30 in 0 : vector<1x128xf32>, vector<1x128xf32> -> vector<2x128xf32>
    %c6 = arith.constant 6 : index
    %32 = memref.load %arg0[%c6] : memref<16xi32, #tpu.memory_space<smem>>
    %33 = arith.index_cast %32 : i32 to index
    %c0_14 = arith.constant 0 : index
    %34 = vector.load %arg1[%33, %c0_14] : memref<50x128xf32, #tpu.memory_space<vmem>>, vector<1x128xf32>
    %c7 = arith.constant 7 : index
    %35 = memref.load %arg0[%c7] : memref<16xi32, #tpu.memory_space<smem>>
    %36 = arith.index_cast %35 : i32 to index
    %c0_15 = arith.constant 0 : index
    %37 = vector.load %arg1[%36, %c0_15] : memref<50x128xf32, #tpu.memory_space<vmem>>, vector<1x128xf32>
    %38 = tpu.concatenate %34, %37 in 0 : vector<1x128xf32>, vector<1x128xf32> -> vector<2x128xf32>
    %c8 = arith.constant 8 : index
    %39 = memref.load %arg0[%c8] : memref<16xi32, #tpu.memory_space<smem>>
    %40 = arith.index_cast %39 : i32 to index
    %c0_16 = arith.constant 0 : index
    %41 = vector.load %arg1[%40, %c0_16] : memref<50x128xf32, #tpu.memory_space<vmem>>, vector<1x128xf32>
    %c9 = arith.constant 9 : index
    %42 = memref.load %arg0[%c9] : memref<16xi32, #tpu.memory_space<smem>>
    %43 = arith.index_cast %42 : i32 to index
    %c0_17 = arith.constant 0 : index
    %44 = vector.load %arg1[%43, %c0_17] : memref<50x128xf32, #tpu.memory_space<vmem>>, vector<1x128xf32>
    %45 = tpu.concatenate %41, %44 in 0 : vector<1x128xf32>, vector<1x128xf32> -> vector<2x128xf32>
    %c10 = arith.constant 10 : index
    %46 = memref.load %arg0[%c10] : memref<16xi32, #tpu.memory_space<smem>>
    %47 = arith.index_cast %46 : i32 to index
    %c0_18 = arith.constant 0 : index
    %48 = vector.load %arg1[%47, %c0_18] : memref<50x128xf32, #tpu.memory_space<vmem>>, vector<1x128xf32>
    %c11 = arith.constant 11 : index
    %49 = memref.load %arg0[%c11] : memref<16xi32, #tpu.memory_space<smem>>
    %50 = arith.index_cast %49 : i32 to index
    %c0_19 = arith.constant 0 : index
    %51 = vector.load %arg1[%50, %c0_19] : memref<50x128xf32, #tpu.memory_space<vmem>>, vector<1x128xf32>
    %52 = tpu.concatenate %48, %51 in 0 : vector<1x128xf32>, vector<1x128xf32> -> vector<2x128xf32>
    %c12 = arith.constant 12 : index
    %53 = memref.load %arg0[%c12] : memref<16xi32, #tpu.memory_space<smem>>
    %54 = arith.index_cast %53 : i32 to index
    %c0_20 = arith.constant 0 : index
    %55 = vector.load %arg1[%54, %c0_20] : memref<50x128xf32, #tpu.memory_space<vmem>>, vector<1x128xf32>
    %c13 = arith.constant 13 : index
    %56 = memref.load %arg0[%c13] : memref<16xi32, #tpu.memory_space<smem>>
    %57 = arith.index_cast %56 : i32 to index
    %c0_21 = arith.constant 0 : index
    %58 = vector.load %arg1[%57, %c0_21] : memref<50x128xf32, #tpu.memory_space<vmem>>, vector<1x128xf32>
    %59 = tpu.concatenate %55, %58 in 0 : vector<1x128xf32>, vector<1x128xf32> -> vector<2x128xf32>
    %c14 = arith.constant 14 : index
    %60 = memref.load %arg0[%c14] : memref<16xi32, #tpu.memory_space<smem>>
    %61 = arith.index_cast %60 : i32 to index
    %c0_22 = arith.constant 0 : index
    %62 = vector.load %arg1[%61, %c0_22] : memref<50x128xf32, #tpu.memory_space<vmem>>, vector<1x128xf32>
    %c15 = arith.constant 15 : index
    %63 = memref.load %arg0[%c15] : memref<16xi32, #tpu.memory_space<smem>>
    %64 = arith.index_cast %63 : i32 to index
    %c0_23 = arith.constant 0 : index
    %65 = vector.load %arg1[%64, %c0_23] : memref<50x128xf32, #tpu.memory_space<vmem>>, vector<1x128xf32>
    %66 = tpu.concatenate %62, %65 in 0 : vector<1x128xf32>, vector<1x128xf32> -> vector<2x128xf32>
    %cst = arith.constant 0.000000e+00 : f32
    %67 = vector.broadcast %cst : f32 to vector<2x32xf32>
    %cst_24 = arith.constant 0.000000e+00 : f32
    %68 = vector.broadcast %cst_24 : f32 to vector<2x32xf32>
    %cst_25 = arith.constant dense<0.000000e+00> : vector<2x128xf32>
    %69 = tpu.matmul %67, %0, %cst_25 {dimension_numbers = #tpu.dot_dimension_numbers<[1], [0], [0], [1], [0, 0, 1, 1], [], []>} : vector<2x32xf32>, vector<32x128xf32>, vector<2x128xf32> -> vector<2x128xf32>
    %70 = arith.addf %69, %6 : vector<2x128xf32>
    %71 = arith.addf %17, %70 : vector<2x128xf32>
    %72 = vector.extract_strided_slice %71 {offsets = [0, 0], sizes = [2, 32], strides = [1, 1]} : vector<2x128xf32> to vector<2x32xf32>
    %73 = arith.negf %72 : vector<2x32xf32>
    %74 = math.exp %73 : vector<2x32xf32>
    %cst_26 = arith.constant 1.000000e+00 : f32
    %75 = vector.broadcast %cst_26 : f32 to vector<2x32xf32>
    %76 = arith.addf %75, %74 : vector<2x32xf32>
    %77 = arith.divf %75, %76 : vector<2x32xf32>
    %78 = vector.extract_strided_slice %71 {offsets = [0, 32], sizes = [2, 32], strides = [1, 1]} : vector<2x128xf32> to vector<2x32xf32>
    %79 = arith.negf %78 : vector<2x32xf32>
    %80 = math.exp %79 : vector<2x32xf32>
    %cst_27 = arith.constant 1.000000e+00 : f32
    %81 = vector.broadcast %cst_27 : f32 to vector<2x32xf32>
    %82 = arith.addf %81, %80 : vector<2x32xf32>
    %83 = arith.divf %81, %82 : vector<2x32xf32>
    %84 = vector.extract_strided_slice %17 {offsets = [0, 64], sizes = [2, 32], strides = [1, 1]} : vector<2x128xf32> to vector<2x32xf32>
    %85 = vector.extract_strided_slice %70 {offsets = [0, 64], sizes = [2, 32], strides = [1, 1]} : vector<2x128xf32> to vector<2x32xf32>
    %86 = arith.mulf %77, %85 : vector<2x32xf32>
    %87 = arith.addf %84, %86 : vector<2x32xf32>
    %88 = math.tanh %87 : vector<2x32xf32>
    %cst_28 = arith.constant 1.000000e+00 : f32
    %89 = vector.broadcast %cst_28 : f32 to vector<2x32xf32>
    %90 = arith.subf %89, %83 : vector<2x32xf32>
    %91 = arith.mulf %90, %88 : vector<2x32xf32>
    %92 = arith.mulf %83, %67 : vector<2x32xf32>
    %93 = arith.addf %91, %92 : vector<2x32xf32>
    %cst_29 = arith.constant dense<0.000000e+00> : vector<2x128xf32>
    %94 = tpu.matmul %93, %1, %cst_29 {dimension_numbers = #tpu.dot_dimension_numbers<[1], [0], [0], [1], [0, 0, 1, 1], [], []>} : vector<2x32xf32>, vector<32x128xf32>, vector<2x128xf32> -> vector<2x128xf32>
    %cst_30 = arith.constant dense<0.000000e+00> : vector<2x128xf32>
    %95 = tpu.matmul %68, %2, %cst_30 {dimension_numbers = #tpu.dot_dimension_numbers<[1], [0], [0], [1], [0, 0, 1, 1], [], []>} : vector<2x32xf32>, vector<32x128xf32>, vector<2x128xf32> -> vector<2x128xf32>
    %96 = arith.addf %94, %95 : vector<2x128xf32>
    %97 = arith.addf %96, %9 : vector<2x128xf32>
    %98 = vector.extract_strided_slice %97 {offsets = [0, 0], sizes = [2, 32], strides = [1, 1]} : vector<2x128xf32> to vector<2x32xf32>
    %99 = arith.negf %98 : vector<2x32xf32>
    %100 = math.exp %99 : vector<2x32xf32>
    %cst_31 = arith.constant 1.000000e+00 : f32
    %101 = vector.broadcast %cst_31 : f32 to vector<2x32xf32>
    %102 = arith.addf %101, %100 : vector<2x32xf32>
    %103 = arith.divf %101, %102 : vector<2x32xf32>
    %104 = vector.extract_strided_slice %97 {offsets = [0, 32], sizes = [2, 32], strides = [1, 1]} : vector<2x128xf32> to vector<2x32xf32>
    %105 = arith.negf %104 : vector<2x32xf32>
    %106 = math.exp %105 : vector<2x32xf32>
    %cst_32 = arith.constant 1.000000e+00 : f32
    %107 = vector.broadcast %cst_32 : f32 to vector<2x32xf32>
    %108 = arith.addf %107, %106 : vector<2x32xf32>
    %109 = arith.divf %107, %108 : vector<2x32xf32>
    %110 = vector.extract_strided_slice %97 {offsets = [0, 64], sizes = [2, 32], strides = [1, 1]} : vector<2x128xf32> to vector<2x32xf32>
    %111 = vector.extract_strided_slice %97 {offsets = [0, 96], sizes = [2, 32], strides = [1, 1]} : vector<2x128xf32> to vector<2x32xf32>
    %112 = arith.mulf %103, %111 : vector<2x32xf32>
    %113 = arith.addf %110, %112 : vector<2x32xf32>
    %114 = math.tanh %113 : vector<2x32xf32>
    %cst_33 = arith.constant 1.000000e+00 : f32
    %115 = vector.broadcast %cst_33 : f32 to vector<2x32xf32>
    %116 = arith.subf %115, %109 : vector<2x32xf32>
    %117 = arith.mulf %116, %114 : vector<2x32xf32>
    %118 = arith.mulf %109, %68 : vector<2x32xf32>
    %119 = arith.addf %117, %118 : vector<2x32xf32>
    %cst_34 = arith.constant dense<0.000000e+00> : vector<2x128xf32>
    %120 = tpu.matmul %93, %0, %cst_34 {dimension_numbers = #tpu.dot_dimension_numbers<[1], [0], [0], [1], [0, 0, 1, 1], [], []>} : vector<2x32xf32>, vector<32x128xf32>, vector<2x128xf32> -> vector<2x128xf32>
    %121 = arith.addf %120, %6 : vector<2x128xf32>
    %122 = arith.addf %24, %121 : vector<2x128xf32>
    %123 = vector.extract_strided_slice %122 {offsets = [0, 0], sizes = [2, 32], strides = [1, 1]} : vector<2x128xf32> to vector<2x32xf32>
    %124 = arith.negf %123 : vector<2x32xf32>
    %125 = math.exp %124 : vector<2x32xf32>
    %cst_35 = arith.constant 1.000000e+00 : f32
    %126 = vector.broadcast %cst_35 : f32 to vector<2x32xf32>
    %127 = arith.addf %126, %125 : vector<2x32xf32>
    %128 = arith.divf %126, %127 : vector<2x32xf32>
    %129 = vector.extract_strided_slice %122 {offsets = [0, 32], sizes = [2, 32], strides = [1, 1]} : vector<2x128xf32> to vector<2x32xf32>
    %130 = arith.negf %129 : vector<2x32xf32>
    %131 = math.exp %130 : vector<2x32xf32>
    %cst_36 = arith.constant 1.000000e+00 : f32
    %132 = vector.broadcast %cst_36 : f32 to vector<2x32xf32>
    %133 = arith.addf %132, %131 : vector<2x32xf32>
    %134 = arith.divf %132, %133 : vector<2x32xf32>
    %135 = vector.extract_strided_slice %24 {offsets = [0, 64], sizes = [2, 32], strides = [1, 1]} : vector<2x128xf32> to vector<2x32xf32>
    %136 = vector.extract_strided_slice %121 {offsets = [0, 64], sizes = [2, 32], strides = [1, 1]} : vector<2x128xf32> to vector<2x32xf32>
    %137 = arith.mulf %128, %136 : vector<2x32xf32>
    %138 = arith.addf %135, %137 : vector<2x32xf32>
    %139 = math.tanh %138 : vector<2x32xf32>
    %cst_37 = arith.constant 1.000000e+00 : f32
    %140 = vector.broadcast %cst_37 : f32 to vector<2x32xf32>
    %141 = arith.subf %140, %134 : vector<2x32xf32>
    %142 = arith.mulf %141, %139 : vector<2x32xf32>
    %143 = arith.mulf %134, %93 : vector<2x32xf32>
    %144 = arith.addf %142, %143 : vector<2x32xf32>
    %cst_38 = arith.constant dense<0.000000e+00> : vector<2x128xf32>
    %145 = tpu.matmul %144, %1, %cst_38 {dimension_numbers = #tpu.dot_dimension_numbers<[1], [0], [0], [1], [0, 0, 1, 1], [], []>} : vector<2x32xf32>, vector<32x128xf32>, vector<2x128xf32> -> vector<2x128xf32>
    %cst_39 = arith.constant dense<0.000000e+00> : vector<2x128xf32>
    %146 = tpu.matmul %119, %2, %cst_39 {dimension_numbers = #tpu.dot_dimension_numbers<[1], [0], [0], [1], [0, 0, 1, 1], [], []>} : vector<2x32xf32>, vector<32x128xf32>, vector<2x128xf32> -> vector<2x128xf32>
    %147 = arith.addf %145, %146 : vector<2x128xf32>
    %148 = arith.addf %147, %9 : vector<2x128xf32>
    %149 = vector.extract_strided_slice %148 {offsets = [0, 0], sizes = [2, 32], strides = [1, 1]} : vector<2x128xf32> to vector<2x32xf32>
    %150 = arith.negf %149 : vector<2x32xf32>
    %151 = math.exp %150 : vector<2x32xf32>
    %cst_40 = arith.constant 1.000000e+00 : f32
    %152 = vector.broadcast %cst_40 : f32 to vector<2x32xf32>
    %153 = arith.addf %152, %151 : vector<2x32xf32>
    %154 = arith.divf %152, %153 : vector<2x32xf32>
    %155 = vector.extract_strided_slice %148 {offsets = [0, 32], sizes = [2, 32], strides = [1, 1]} : vector<2x128xf32> to vector<2x32xf32>
    %156 = arith.negf %155 : vector<2x32xf32>
    %157 = math.exp %156 : vector<2x32xf32>
    %cst_41 = arith.constant 1.000000e+00 : f32
    %158 = vector.broadcast %cst_41 : f32 to vector<2x32xf32>
    %159 = arith.addf %158, %157 : vector<2x32xf32>
    %160 = arith.divf %158, %159 : vector<2x32xf32>
    %161 = vector.extract_strided_slice %148 {offsets = [0, 64], sizes = [2, 32], strides = [1, 1]} : vector<2x128xf32> to vector<2x32xf32>
    %162 = vector.extract_strided_slice %148 {offsets = [0, 96], sizes = [2, 32], strides = [1, 1]} : vector<2x128xf32> to vector<2x32xf32>
    %163 = arith.mulf %154, %162 : vector<2x32xf32>
    %164 = arith.addf %161, %163 : vector<2x32xf32>
    %165 = math.tanh %164 : vector<2x32xf32>
    %cst_42 = arith.constant 1.000000e+00 : f32
    %166 = vector.broadcast %cst_42 : f32 to vector<2x32xf32>
    %167 = arith.subf %166, %160 : vector<2x32xf32>
    %168 = arith.mulf %167, %165 : vector<2x32xf32>
    %169 = arith.mulf %160, %119 : vector<2x32xf32>
    %170 = arith.addf %168, %169 : vector<2x32xf32>
    %cst_43 = arith.constant dense<0.000000e+00> : vector<2x128xf32>
    %171 = tpu.matmul %144, %0, %cst_43 {dimension_numbers = #tpu.dot_dimension_numbers<[1], [0], [0], [1], [0, 0, 1, 1], [], []>} : vector<2x32xf32>, vector<32x128xf32>, vector<2x128xf32> -> vector<2x128xf32>
    %172 = arith.addf %171, %6 : vector<2x128xf32>
    %173 = arith.addf %31, %172 : vector<2x128xf32>
    %174 = vector.extract_strided_slice %173 {offsets = [0, 0], sizes = [2, 32], strides = [1, 1]} : vector<2x128xf32> to vector<2x32xf32>
    %175 = arith.negf %174 : vector<2x32xf32>
    %176 = math.exp %175 : vector<2x32xf32>
    %cst_44 = arith.constant 1.000000e+00 : f32
    %177 = vector.broadcast %cst_44 : f32 to vector<2x32xf32>
    %178 = arith.addf %177, %176 : vector<2x32xf32>
    %179 = arith.divf %177, %178 : vector<2x32xf32>
    %180 = vector.extract_strided_slice %173 {offsets = [0, 32], sizes = [2, 32], strides = [1, 1]} : vector<2x128xf32> to vector<2x32xf32>
    %181 = arith.negf %180 : vector<2x32xf32>
    %182 = math.exp %181 : vector<2x32xf32>
    %cst_45 = arith.constant 1.000000e+00 : f32
    %183 = vector.broadcast %cst_45 : f32 to vector<2x32xf32>
    %184 = arith.addf %183, %182 : vector<2x32xf32>
    %185 = arith.divf %183, %184 : vector<2x32xf32>
    %186 = vector.extract_strided_slice %31 {offsets = [0, 64], sizes = [2, 32], strides = [1, 1]} : vector<2x128xf32> to vector<2x32xf32>
    %187 = vector.extract_strided_slice %172 {offsets = [0, 64], sizes = [2, 32], strides = [1, 1]} : vector<2x128xf32> to vector<2x32xf32>
    %188 = arith.mulf %179, %187 : vector<2x32xf32>
    %189 = arith.addf %186, %188 : vector<2x32xf32>
    %190 = math.tanh %189 : vector<2x32xf32>
    %cst_46 = arith.constant 1.000000e+00 : f32
    %191 = vector.broadcast %cst_46 : f32 to vector<2x32xf32>
    %192 = arith.subf %191, %185 : vector<2x32xf32>
    %193 = arith.mulf %192, %190 : vector<2x32xf32>
    %194 = arith.mulf %185, %144 : vector<2x32xf32>
    %195 = arith.addf %193, %194 : vector<2x32xf32>
    %cst_47 = arith.constant dense<0.000000e+00> : vector<2x128xf32>
    %196 = tpu.matmul %195, %1, %cst_47 {dimension_numbers = #tpu.dot_dimension_numbers<[1], [0], [0], [1], [0, 0, 1, 1], [], []>} : vector<2x32xf32>, vector<32x128xf32>, vector<2x128xf32> -> vector<2x128xf32>
    %cst_48 = arith.constant dense<0.000000e+00> : vector<2x128xf32>
    %197 = tpu.matmul %170, %2, %cst_48 {dimension_numbers = #tpu.dot_dimension_numbers<[1], [0], [0], [1], [0, 0, 1, 1], [], []>} : vector<2x32xf32>, vector<32x128xf32>, vector<2x128xf32> -> vector<2x128xf32>
    %198 = arith.addf %196, %197 : vector<2x128xf32>
    %199 = arith.addf %198, %9 : vector<2x128xf32>
    %200 = vector.extract_strided_slice %199 {offsets = [0, 0], sizes = [2, 32], strides = [1, 1]} : vector<2x128xf32> to vector<2x32xf32>
    %201 = arith.negf %200 : vector<2x32xf32>
    %202 = math.exp %201 : vector<2x32xf32>
    %cst_49 = arith.constant 1.000000e+00 : f32
    %203 = vector.broadcast %cst_49 : f32 to vector<2x32xf32>
    %204 = arith.addf %203, %202 : vector<2x32xf32>
    %205 = arith.divf %203, %204 : vector<2x32xf32>
    %206 = vector.extract_strided_slice %199 {offsets = [0, 32], sizes = [2, 32], strides = [1, 1]} : vector<2x128xf32> to vector<2x32xf32>
    %207 = arith.negf %206 : vector<2x32xf32>
    %208 = math.exp %207 : vector<2x32xf32>
    %cst_50 = arith.constant 1.000000e+00 : f32
    %209 = vector.broadcast %cst_50 : f32 to vector<2x32xf32>
    %210 = arith.addf %209, %208 : vector<2x32xf32>
    %211 = arith.divf %209, %210 : vector<2x32xf32>
    %212 = vector.extract_strided_slice %199 {offsets = [0, 64], sizes = [2, 32], strides = [1, 1]} : vector<2x128xf32> to vector<2x32xf32>
    %213 = vector.extract_strided_slice %199 {offsets = [0, 96], sizes = [2, 32], strides = [1, 1]} : vector<2x128xf32> to vector<2x32xf32>
    %214 = arith.mulf %205, %213 : vector<2x32xf32>
    %215 = arith.addf %212, %214 : vector<2x32xf32>
    %216 = math.tanh %215 : vector<2x32xf32>
    %cst_51 = arith.constant 1.000000e+00 : f32
    %217 = vector.broadcast %cst_51 : f32 to vector<2x32xf32>
    %218 = arith.subf %217, %211 : vector<2x32xf32>
    %219 = arith.mulf %218, %216 : vector<2x32xf32>
    %220 = arith.mulf %211, %170 : vector<2x32xf32>
    %221 = arith.addf %219, %220 : vector<2x32xf32>
    %cst_52 = arith.constant dense<0.000000e+00> : vector<2x128xf32>
    %222 = tpu.matmul %195, %0, %cst_52 {dimension_numbers = #tpu.dot_dimension_numbers<[1], [0], [0], [1], [0, 0, 1, 1], [], []>} : vector<2x32xf32>, vector<32x128xf32>, vector<2x128xf32> -> vector<2x128xf32>
    %223 = arith.addf %222, %6 : vector<2x128xf32>
    %224 = arith.addf %38, %223 : vector<2x128xf32>
    %225 = vector.extract_strided_slice %224 {offsets = [0, 0], sizes = [2, 32], strides = [1, 1]} : vector<2x128xf32> to vector<2x32xf32>
    %226 = arith.negf %225 : vector<2x32xf32>
    %227 = math.exp %226 : vector<2x32xf32>
    %cst_53 = arith.constant 1.000000e+00 : f32
    %228 = vector.broadcast %cst_53 : f32 to vector<2x32xf32>
    %229 = arith.addf %228, %227 : vector<2x32xf32>
    %230 = arith.divf %228, %229 : vector<2x32xf32>
    %231 = vector.extract_strided_slice %224 {offsets = [0, 32], sizes = [2, 32], strides = [1, 1]} : vector<2x128xf32> to vector<2x32xf32>
    %232 = arith.negf %231 : vector<2x32xf32>
    %233 = math.exp %232 : vector<2x32xf32>
    %cst_54 = arith.constant 1.000000e+00 : f32
    %234 = vector.broadcast %cst_54 : f32 to vector<2x32xf32>
    %235 = arith.addf %234, %233 : vector<2x32xf32>
    %236 = arith.divf %234, %235 : vector<2x32xf32>
    %237 = vector.extract_strided_slice %38 {offsets = [0, 64], sizes = [2, 32], strides = [1, 1]} : vector<2x128xf32> to vector<2x32xf32>
    %238 = vector.extract_strided_slice %223 {offsets = [0, 64], sizes = [2, 32], strides = [1, 1]} : vector<2x128xf32> to vector<2x32xf32>
    %239 = arith.mulf %230, %238 : vector<2x32xf32>
    %240 = arith.addf %237, %239 : vector<2x32xf32>
    %241 = math.tanh %240 : vector<2x32xf32>
    %cst_55 = arith.constant 1.000000e+00 : f32
    %242 = vector.broadcast %cst_55 : f32 to vector<2x32xf32>
    %243 = arith.subf %242, %236 : vector<2x32xf32>
    %244 = arith.mulf %243, %241 : vector<2x32xf32>
    %245 = arith.mulf %236, %195 : vector<2x32xf32>
    %246 = arith.addf %244, %245 : vector<2x32xf32>
    %cst_56 = arith.constant dense<0.000000e+00> : vector<2x128xf32>
    %247 = tpu.matmul %246, %1, %cst_56 {dimension_numbers = #tpu.dot_dimension_numbers<[1], [0], [0], [1], [0, 0, 1, 1], [], []>} : vector<2x32xf32>, vector<32x128xf32>, vector<2x128xf32> -> vector<2x128xf32>
    %cst_57 = arith.constant dense<0.000000e+00> : vector<2x128xf32>
    %248 = tpu.matmul %221, %2, %cst_57 {dimension_numbers = #tpu.dot_dimension_numbers<[1], [0], [0], [1], [0, 0, 1, 1], [], []>} : vector<2x32xf32>, vector<32x128xf32>, vector<2x128xf32> -> vector<2x128xf32>
    %249 = arith.addf %247, %248 : vector<2x128xf32>
    %250 = arith.addf %249, %9 : vector<2x128xf32>
    %251 = vector.extract_strided_slice %250 {offsets = [0, 0], sizes = [2, 32], strides = [1, 1]} : vector<2x128xf32> to vector<2x32xf32>
    %252 = arith.negf %251 : vector<2x32xf32>
    %253 = math.exp %252 : vector<2x32xf32>
    %cst_58 = arith.constant 1.000000e+00 : f32
    %254 = vector.broadcast %cst_58 : f32 to vector<2x32xf32>
    %255 = arith.addf %254, %253 : vector<2x32xf32>
    %256 = arith.divf %254, %255 : vector<2x32xf32>
    %257 = vector.extract_strided_slice %250 {offsets = [0, 32], sizes = [2, 32], strides = [1, 1]} : vector<2x128xf32> to vector<2x32xf32>
    %258 = arith.negf %257 : vector<2x32xf32>
    %259 = math.exp %258 : vector<2x32xf32>
    %cst_59 = arith.constant 1.000000e+00 : f32
    %260 = vector.broadcast %cst_59 : f32 to vector<2x32xf32>
    %261 = arith.addf %260, %259 : vector<2x32xf32>
    %262 = arith.divf %260, %261 : vector<2x32xf32>
    %263 = vector.extract_strided_slice %250 {offsets = [0, 64], sizes = [2, 32], strides = [1, 1]} : vector<2x128xf32> to vector<2x32xf32>
    %264 = vector.extract_strided_slice %250 {offsets = [0, 96], sizes = [2, 32], strides = [1, 1]} : vector<2x128xf32> to vector<2x32xf32>
    %265 = arith.mulf %256, %264 : vector<2x32xf32>
    %266 = arith.addf %263, %265 : vector<2x32xf32>
    %267 = math.tanh %266 : vector<2x32xf32>
    %cst_60 = arith.constant 1.000000e+00 : f32
    %268 = vector.broadcast %cst_60 : f32 to vector<2x32xf32>
    %269 = arith.subf %268, %262 : vector<2x32xf32>
    %270 = arith.mulf %269, %267 : vector<2x32xf32>
    %271 = arith.mulf %262, %221 : vector<2x32xf32>
    %272 = arith.addf %270, %271 : vector<2x32xf32>
    %cst_61 = arith.constant dense<0.000000e+00> : vector<2x128xf32>
    %273 = tpu.matmul %246, %0, %cst_61 {dimension_numbers = #tpu.dot_dimension_numbers<[1], [0], [0], [1], [0, 0, 1, 1], [], []>} : vector<2x32xf32>, vector<32x128xf32>, vector<2x128xf32> -> vector<2x128xf32>
    %274 = arith.addf %273, %6 : vector<2x128xf32>
    %275 = arith.addf %45, %274 : vector<2x128xf32>
    %276 = vector.extract_strided_slice %275 {offsets = [0, 0], sizes = [2, 32], strides = [1, 1]} : vector<2x128xf32> to vector<2x32xf32>
    %277 = arith.negf %276 : vector<2x32xf32>
    %278 = math.exp %277 : vector<2x32xf32>
    %cst_62 = arith.constant 1.000000e+00 : f32
    %279 = vector.broadcast %cst_62 : f32 to vector<2x32xf32>
    %280 = arith.addf %279, %278 : vector<2x32xf32>
    %281 = arith.divf %279, %280 : vector<2x32xf32>
    %282 = vector.extract_strided_slice %275 {offsets = [0, 32], sizes = [2, 32], strides = [1, 1]} : vector<2x128xf32> to vector<2x32xf32>
    %283 = arith.negf %282 : vector<2x32xf32>
    %284 = math.exp %283 : vector<2x32xf32>
    %cst_63 = arith.constant 1.000000e+00 : f32
    %285 = vector.broadcast %cst_63 : f32 to vector<2x32xf32>
    %286 = arith.addf %285, %284 : vector<2x32xf32>
    %287 = arith.divf %285, %286 : vector<2x32xf32>
    %288 = vector.extract_strided_slice %45 {offsets = [0, 64], sizes = [2, 32], strides = [1, 1]} : vector<2x128xf32> to vector<2x32xf32>
    %289 = vector.extract_strided_slice %274 {offsets = [0, 64], sizes = [2, 32], strides = [1, 1]} : vector<2x128xf32> to vector<2x32xf32>
    %290 = arith.mulf %281, %289 : vector<2x32xf32>
    %291 = arith.addf %288, %290 : vector<2x32xf32>
    %292 = math.tanh %291 : vector<2x32xf32>
    %cst_64 = arith.constant 1.000000e+00 : f32
    %293 = vector.broadcast %cst_64 : f32 to vector<2x32xf32>
    %294 = arith.subf %293, %287 : vector<2x32xf32>
    %295 = arith.mulf %294, %292 : vector<2x32xf32>
    %296 = arith.mulf %287, %246 : vector<2x32xf32>
    %297 = arith.addf %295, %296 : vector<2x32xf32>
    %cst_65 = arith.constant dense<0.000000e+00> : vector<2x128xf32>
    %298 = tpu.matmul %297, %1, %cst_65 {dimension_numbers = #tpu.dot_dimension_numbers<[1], [0], [0], [1], [0, 0, 1, 1], [], []>} : vector<2x32xf32>, vector<32x128xf32>, vector<2x128xf32> -> vector<2x128xf32>
    %cst_66 = arith.constant dense<0.000000e+00> : vector<2x128xf32>
    %299 = tpu.matmul %272, %2, %cst_66 {dimension_numbers = #tpu.dot_dimension_numbers<[1], [0], [0], [1], [0, 0, 1, 1], [], []>} : vector<2x32xf32>, vector<32x128xf32>, vector<2x128xf32> -> vector<2x128xf32>
    %300 = arith.addf %298, %299 : vector<2x128xf32>
    %301 = arith.addf %300, %9 : vector<2x128xf32>
    %302 = vector.extract_strided_slice %301 {offsets = [0, 0], sizes = [2, 32], strides = [1, 1]} : vector<2x128xf32> to vector<2x32xf32>
    %303 = arith.negf %302 : vector<2x32xf32>
    %304 = math.exp %303 : vector<2x32xf32>
    %cst_67 = arith.constant 1.000000e+00 : f32
    %305 = vector.broadcast %cst_67 : f32 to vector<2x32xf32>
    %306 = arith.addf %305, %304 : vector<2x32xf32>
    %307 = arith.divf %305, %306 : vector<2x32xf32>
    %308 = vector.extract_strided_slice %301 {offsets = [0, 32], sizes = [2, 32], strides = [1, 1]} : vector<2x128xf32> to vector<2x32xf32>
    %309 = arith.negf %308 : vector<2x32xf32>
    %310 = math.exp %309 : vector<2x32xf32>
    %cst_68 = arith.constant 1.000000e+00 : f32
    %311 = vector.broadcast %cst_68 : f32 to vector<2x32xf32>
    %312 = arith.addf %311, %310 : vector<2x32xf32>
    %313 = arith.divf %311, %312 : vector<2x32xf32>
    %314 = vector.extract_strided_slice %301 {offsets = [0, 64], sizes = [2, 32], strides = [1, 1]} : vector<2x128xf32> to vector<2x32xf32>
    %315 = vector.extract_strided_slice %301 {offsets = [0, 96], sizes = [2, 32], strides = [1, 1]} : vector<2x128xf32> to vector<2x32xf32>
    %316 = arith.mulf %307, %315 : vector<2x32xf32>
    %317 = arith.addf %314, %316 : vector<2x32xf32>
    %318 = math.tanh %317 : vector<2x32xf32>
    %cst_69 = arith.constant 1.000000e+00 : f32
    %319 = vector.broadcast %cst_69 : f32 to vector<2x32xf32>
    %320 = arith.subf %319, %313 : vector<2x32xf32>
    %321 = arith.mulf %320, %318 : vector<2x32xf32>
    %322 = arith.mulf %313, %272 : vector<2x32xf32>
    %323 = arith.addf %321, %322 : vector<2x32xf32>
    %cst_70 = arith.constant dense<0.000000e+00> : vector<2x128xf32>
    %324 = tpu.matmul %297, %0, %cst_70 {dimension_numbers = #tpu.dot_dimension_numbers<[1], [0], [0], [1], [0, 0, 1, 1], [], []>} : vector<2x32xf32>, vector<32x128xf32>, vector<2x128xf32> -> vector<2x128xf32>
    %325 = arith.addf %324, %6 : vector<2x128xf32>
    %326 = arith.addf %52, %325 : vector<2x128xf32>
    %327 = vector.extract_strided_slice %326 {offsets = [0, 0], sizes = [2, 32], strides = [1, 1]} : vector<2x128xf32> to vector<2x32xf32>
    %328 = arith.negf %327 : vector<2x32xf32>
    %329 = math.exp %328 : vector<2x32xf32>
    %cst_71 = arith.constant 1.000000e+00 : f32
    %330 = vector.broadcast %cst_71 : f32 to vector<2x32xf32>
    %331 = arith.addf %330, %329 : vector<2x32xf32>
    %332 = arith.divf %330, %331 : vector<2x32xf32>
    %333 = vector.extract_strided_slice %326 {offsets = [0, 32], sizes = [2, 32], strides = [1, 1]} : vector<2x128xf32> to vector<2x32xf32>
    %334 = arith.negf %333 : vector<2x32xf32>
    %335 = math.exp %334 : vector<2x32xf32>
    %cst_72 = arith.constant 1.000000e+00 : f32
    %336 = vector.broadcast %cst_72 : f32 to vector<2x32xf32>
    %337 = arith.addf %336, %335 : vector<2x32xf32>
    %338 = arith.divf %336, %337 : vector<2x32xf32>
    %339 = vector.extract_strided_slice %52 {offsets = [0, 64], sizes = [2, 32], strides = [1, 1]} : vector<2x128xf32> to vector<2x32xf32>
    %340 = vector.extract_strided_slice %325 {offsets = [0, 64], sizes = [2, 32], strides = [1, 1]} : vector<2x128xf32> to vector<2x32xf32>
    %341 = arith.mulf %332, %340 : vector<2x32xf32>
    %342 = arith.addf %339, %341 : vector<2x32xf32>
    %343 = math.tanh %342 : vector<2x32xf32>
    %cst_73 = arith.constant 1.000000e+00 : f32
    %344 = vector.broadcast %cst_73 : f32 to vector<2x32xf32>
    %345 = arith.subf %344, %338 : vector<2x32xf32>
    %346 = arith.mulf %345, %343 : vector<2x32xf32>
    %347 = arith.mulf %338, %297 : vector<2x32xf32>
    %348 = arith.addf %346, %347 : vector<2x32xf32>
    %cst_74 = arith.constant dense<0.000000e+00> : vector<2x128xf32>
    %349 = tpu.matmul %348, %1, %cst_74 {dimension_numbers = #tpu.dot_dimension_numbers<[1], [0], [0], [1], [0, 0, 1, 1], [], []>} : vector<2x32xf32>, vector<32x128xf32>, vector<2x128xf32> -> vector<2x128xf32>
    %cst_75 = arith.constant dense<0.000000e+00> : vector<2x128xf32>
    %350 = tpu.matmul %323, %2, %cst_75 {dimension_numbers = #tpu.dot_dimension_numbers<[1], [0], [0], [1], [0, 0, 1, 1], [], []>} : vector<2x32xf32>, vector<32x128xf32>, vector<2x128xf32> -> vector<2x128xf32>
    %351 = arith.addf %349, %350 : vector<2x128xf32>
    %352 = arith.addf %351, %9 : vector<2x128xf32>
    %353 = vector.extract_strided_slice %352 {offsets = [0, 0], sizes = [2, 32], strides = [1, 1]} : vector<2x128xf32> to vector<2x32xf32>
    %354 = arith.negf %353 : vector<2x32xf32>
    %355 = math.exp %354 : vector<2x32xf32>
    %cst_76 = arith.constant 1.000000e+00 : f32
    %356 = vector.broadcast %cst_76 : f32 to vector<2x32xf32>
    %357 = arith.addf %356, %355 : vector<2x32xf32>
    %358 = arith.divf %356, %357 : vector<2x32xf32>
    %359 = vector.extract_strided_slice %352 {offsets = [0, 32], sizes = [2, 32], strides = [1, 1]} : vector<2x128xf32> to vector<2x32xf32>
    %360 = arith.negf %359 : vector<2x32xf32>
    %361 = math.exp %360 : vector<2x32xf32>
    %cst_77 = arith.constant 1.000000e+00 : f32
    %362 = vector.broadcast %cst_77 : f32 to vector<2x32xf32>
    %363 = arith.addf %362, %361 : vector<2x32xf32>
    %364 = arith.divf %362, %363 : vector<2x32xf32>
    %365 = vector.extract_strided_slice %352 {offsets = [0, 64], sizes = [2, 32], strides = [1, 1]} : vector<2x128xf32> to vector<2x32xf32>
    %366 = vector.extract_strided_slice %352 {offsets = [0, 96], sizes = [2, 32], strides = [1, 1]} : vector<2x128xf32> to vector<2x32xf32>
    %367 = arith.mulf %358, %366 : vector<2x32xf32>
    %368 = arith.addf %365, %367 : vector<2x32xf32>
    %369 = math.tanh %368 : vector<2x32xf32>
    %cst_78 = arith.constant 1.000000e+00 : f32
    %370 = vector.broadcast %cst_78 : f32 to vector<2x32xf32>
    %371 = arith.subf %370, %364 : vector<2x32xf32>
    %372 = arith.mulf %371, %369 : vector<2x32xf32>
    %373 = arith.mulf %364, %323 : vector<2x32xf32>
    %374 = arith.addf %372, %373 : vector<2x32xf32>
    %cst_79 = arith.constant dense<0.000000e+00> : vector<2x128xf32>
    %375 = tpu.matmul %348, %0, %cst_79 {dimension_numbers = #tpu.dot_dimension_numbers<[1], [0], [0], [1], [0, 0, 1, 1], [], []>} : vector<2x32xf32>, vector<32x128xf32>, vector<2x128xf32> -> vector<2x128xf32>
    %376 = arith.addf %375, %6 : vector<2x128xf32>
    %377 = arith.addf %59, %376 : vector<2x128xf32>
    %378 = vector.extract_strided_slice %377 {offsets = [0, 0], sizes = [2, 32], strides = [1, 1]} : vector<2x128xf32> to vector<2x32xf32>
    %379 = arith.negf %378 : vector<2x32xf32>
    %380 = math.exp %379 : vector<2x32xf32>
    %cst_80 = arith.constant 1.000000e+00 : f32
    %381 = vector.broadcast %cst_80 : f32 to vector<2x32xf32>
    %382 = arith.addf %381, %380 : vector<2x32xf32>
    %383 = arith.divf %381, %382 : vector<2x32xf32>
    %384 = vector.extract_strided_slice %377 {offsets = [0, 32], sizes = [2, 32], strides = [1, 1]} : vector<2x128xf32> to vector<2x32xf32>
    %385 = arith.negf %384 : vector<2x32xf32>
    %386 = math.exp %385 : vector<2x32xf32>
    %cst_81 = arith.constant 1.000000e+00 : f32
    %387 = vector.broadcast %cst_81 : f32 to vector<2x32xf32>
    %388 = arith.addf %387, %386 : vector<2x32xf32>
    %389 = arith.divf %387, %388 : vector<2x32xf32>
    %390 = vector.extract_strided_slice %59 {offsets = [0, 64], sizes = [2, 32], strides = [1, 1]} : vector<2x128xf32> to vector<2x32xf32>
    %391 = vector.extract_strided_slice %376 {offsets = [0, 64], sizes = [2, 32], strides = [1, 1]} : vector<2x128xf32> to vector<2x32xf32>
    %392 = arith.mulf %383, %391 : vector<2x32xf32>
    %393 = arith.addf %390, %392 : vector<2x32xf32>
    %394 = math.tanh %393 : vector<2x32xf32>
    %cst_82 = arith.constant 1.000000e+00 : f32
    %395 = vector.broadcast %cst_82 : f32 to vector<2x32xf32>
    %396 = arith.subf %395, %389 : vector<2x32xf32>
    %397 = arith.mulf %396, %394 : vector<2x32xf32>
    %398 = arith.mulf %389, %348 : vector<2x32xf32>
    %399 = arith.addf %397, %398 : vector<2x32xf32>
    %cst_83 = arith.constant dense<0.000000e+00> : vector<2x128xf32>
    %400 = tpu.matmul %399, %1, %cst_83 {dimension_numbers = #tpu.dot_dimension_numbers<[1], [0], [0], [1], [0, 0, 1, 1], [], []>} : vector<2x32xf32>, vector<32x128xf32>, vector<2x128xf32> -> vector<2x128xf32>
    %cst_84 = arith.constant dense<0.000000e+00> : vector<2x128xf32>
    %401 = tpu.matmul %374, %2, %cst_84 {dimension_numbers = #tpu.dot_dimension_numbers<[1], [0], [0], [1], [0, 0, 1, 1], [], []>} : vector<2x32xf32>, vector<32x128xf32>, vector<2x128xf32> -> vector<2x128xf32>
    %402 = arith.addf %400, %401 : vector<2x128xf32>
    %403 = arith.addf %402, %9 : vector<2x128xf32>
    %404 = vector.extract_strided_slice %403 {offsets = [0, 0], sizes = [2, 32], strides = [1, 1]} : vector<2x128xf32> to vector<2x32xf32>
    %405 = arith.negf %404 : vector<2x32xf32>
    %406 = math.exp %405 : vector<2x32xf32>
    %cst_85 = arith.constant 1.000000e+00 : f32
    %407 = vector.broadcast %cst_85 : f32 to vector<2x32xf32>
    %408 = arith.addf %407, %406 : vector<2x32xf32>
    %409 = arith.divf %407, %408 : vector<2x32xf32>
    %410 = vector.extract_strided_slice %403 {offsets = [0, 32], sizes = [2, 32], strides = [1, 1]} : vector<2x128xf32> to vector<2x32xf32>
    %411 = arith.negf %410 : vector<2x32xf32>
    %412 = math.exp %411 : vector<2x32xf32>
    %cst_86 = arith.constant 1.000000e+00 : f32
    %413 = vector.broadcast %cst_86 : f32 to vector<2x32xf32>
    %414 = arith.addf %413, %412 : vector<2x32xf32>
    %415 = arith.divf %413, %414 : vector<2x32xf32>
    %416 = vector.extract_strided_slice %403 {offsets = [0, 64], sizes = [2, 32], strides = [1, 1]} : vector<2x128xf32> to vector<2x32xf32>
    %417 = vector.extract_strided_slice %403 {offsets = [0, 96], sizes = [2, 32], strides = [1, 1]} : vector<2x128xf32> to vector<2x32xf32>
    %418 = arith.mulf %409, %417 : vector<2x32xf32>
    %419 = arith.addf %416, %418 : vector<2x32xf32>
    %420 = math.tanh %419 : vector<2x32xf32>
    %cst_87 = arith.constant 1.000000e+00 : f32
    %421 = vector.broadcast %cst_87 : f32 to vector<2x32xf32>
    %422 = arith.subf %421, %415 : vector<2x32xf32>
    %423 = arith.mulf %422, %420 : vector<2x32xf32>
    %424 = arith.mulf %415, %374 : vector<2x32xf32>
    %425 = arith.addf %423, %424 : vector<2x32xf32>
    %cst_88 = arith.constant dense<0.000000e+00> : vector<2x128xf32>
    %426 = tpu.matmul %399, %0, %cst_88 {dimension_numbers = #tpu.dot_dimension_numbers<[1], [0], [0], [1], [0, 0, 1, 1], [], []>} : vector<2x32xf32>, vector<32x128xf32>, vector<2x128xf32> -> vector<2x128xf32>
    %427 = arith.addf %426, %6 : vector<2x128xf32>
    %428 = arith.addf %66, %427 : vector<2x128xf32>
    %429 = vector.extract_strided_slice %428 {offsets = [0, 0], sizes = [2, 32], strides = [1, 1]} : vector<2x128xf32> to vector<2x32xf32>
    %430 = arith.negf %429 : vector<2x32xf32>
    %431 = math.exp %430 : vector<2x32xf32>
    %cst_89 = arith.constant 1.000000e+00 : f32
    %432 = vector.broadcast %cst_89 : f32 to vector<2x32xf32>
    %433 = arith.addf %432, %431 : vector<2x32xf32>
    %434 = arith.divf %432, %433 : vector<2x32xf32>
    %435 = vector.extract_strided_slice %428 {offsets = [0, 32], sizes = [2, 32], strides = [1, 1]} : vector<2x128xf32> to vector<2x32xf32>
    %436 = arith.negf %435 : vector<2x32xf32>
    %437 = math.exp %436 : vector<2x32xf32>
    %cst_90 = arith.constant 1.000000e+00 : f32
    %438 = vector.broadcast %cst_90 : f32 to vector<2x32xf32>
    %439 = arith.addf %438, %437 : vector<2x32xf32>
    %440 = arith.divf %438, %439 : vector<2x32xf32>
    %441 = vector.extract_strided_slice %66 {offsets = [0, 64], sizes = [2, 32], strides = [1, 1]} : vector<2x128xf32> to vector<2x32xf32>
    %442 = vector.extract_strided_slice %427 {offsets = [0, 64], sizes = [2, 32], strides = [1, 1]} : vector<2x128xf32> to vector<2x32xf32>
    %443 = arith.mulf %434, %442 : vector<2x32xf32>
    %444 = arith.addf %441, %443 : vector<2x32xf32>
    %445 = math.tanh %444 : vector<2x32xf32>
    %cst_91 = arith.constant 1.000000e+00 : f32
    %446 = vector.broadcast %cst_91 : f32 to vector<2x32xf32>
    %447 = arith.subf %446, %440 : vector<2x32xf32>
    %448 = arith.mulf %447, %445 : vector<2x32xf32>
    %449 = arith.mulf %440, %399 : vector<2x32xf32>
    %450 = arith.addf %448, %449 : vector<2x32xf32>
    %cst_92 = arith.constant dense<0.000000e+00> : vector<2x128xf32>
    %451 = tpu.matmul %450, %1, %cst_92 {dimension_numbers = #tpu.dot_dimension_numbers<[1], [0], [0], [1], [0, 0, 1, 1], [], []>} : vector<2x32xf32>, vector<32x128xf32>, vector<2x128xf32> -> vector<2x128xf32>
    %cst_93 = arith.constant dense<0.000000e+00> : vector<2x128xf32>
    %452 = tpu.matmul %425, %2, %cst_93 {dimension_numbers = #tpu.dot_dimension_numbers<[1], [0], [0], [1], [0, 0, 1, 1], [], []>} : vector<2x32xf32>, vector<32x128xf32>, vector<2x128xf32> -> vector<2x128xf32>
    %453 = arith.addf %451, %452 : vector<2x128xf32>
    %454 = arith.addf %453, %9 : vector<2x128xf32>
    %455 = vector.extract_strided_slice %454 {offsets = [0, 0], sizes = [2, 32], strides = [1, 1]} : vector<2x128xf32> to vector<2x32xf32>
    %456 = arith.negf %455 : vector<2x32xf32>
    %457 = math.exp %456 : vector<2x32xf32>
    %cst_94 = arith.constant 1.000000e+00 : f32
    %458 = vector.broadcast %cst_94 : f32 to vector<2x32xf32>
    %459 = arith.addf %458, %457 : vector<2x32xf32>
    %460 = arith.divf %458, %459 : vector<2x32xf32>
    %461 = vector.extract_strided_slice %454 {offsets = [0, 32], sizes = [2, 32], strides = [1, 1]} : vector<2x128xf32> to vector<2x32xf32>
    %462 = arith.negf %461 : vector<2x32xf32>
    %463 = math.exp %462 : vector<2x32xf32>
    %cst_95 = arith.constant 1.000000e+00 : f32
    %464 = vector.broadcast %cst_95 : f32 to vector<2x32xf32>
    %465 = arith.addf %464, %463 : vector<2x32xf32>
    %466 = arith.divf %464, %465 : vector<2x32xf32>
    %467 = vector.extract_strided_slice %454 {offsets = [0, 64], sizes = [2, 32], strides = [1, 1]} : vector<2x128xf32> to vector<2x32xf32>
    %468 = vector.extract_strided_slice %454 {offsets = [0, 96], sizes = [2, 32], strides = [1, 1]} : vector<2x128xf32> to vector<2x32xf32>
    %469 = arith.mulf %460, %468 : vector<2x32xf32>
    %470 = arith.addf %467, %469 : vector<2x32xf32>
    %471 = math.tanh %470 : vector<2x32xf32>
    %cst_96 = arith.constant 1.000000e+00 : f32
    %472 = vector.broadcast %cst_96 : f32 to vector<2x32xf32>
    %473 = arith.subf %472, %466 : vector<2x32xf32>
    %474 = arith.mulf %473, %471 : vector<2x32xf32>
    %475 = arith.mulf %466, %425 : vector<2x32xf32>
    %476 = arith.addf %474, %475 : vector<2x32xf32>
    %cst_97 = arith.constant dense<0.000000e+00> : vector<2x128xf32>
    %477 = tpu.matmul %476, %3, %cst_97 {dimension_numbers = #tpu.dot_dimension_numbers<[1], [0], [0], [1], [0, 0, 1, 1], [], []>} : vector<2x32xf32>, vector<32x128xf32>, vector<2x128xf32> -> vector<2x128xf32>
    %478 = vector.broadcast %10 : vector<1x128xf32> to vector<2x128xf32>
    %479 = arith.addf %477, %478 : vector<2x128xf32>
    %cst_98 = arith.constant 0.000000e+00 : f32
    %480 = vector.broadcast %cst_98 : f32 to vector<2x128xf32>
    %481 = arith.maximumf %479, %480 : vector<2x128xf32>
    %482 = vector.extract_strided_slice %481 {offsets = [0, 0], sizes = [2, 8], strides = [1, 1]} : vector<2x128xf32> to vector<2x8xf32>
    %c0_99 = arith.constant 0 : index
    %c0_100 = arith.constant 0 : index
    %483 = vector.load %arg3[%c0_99, %c0_100] : memref<2x8xf32, #tpu.memory_space<vmem>>, vector<2x8xf32>
    tpu.vector_store %arg3[%c0_99, %c0_100], %482 {strides = array<i32>} : memref<2x8xf32, #tpu.memory_space<vmem>>, vector<2x8xf32>,
    return
  }
}

</mosaic_0001>

<llo_original>
// kernel: idraggn_forward.1
$region0: #{idraggn_forward.1}
  #allocation0 [shape = 'u32[]', space=smem, size = 0x4, offset = 0x4, fixed_abs, tag = 'smem constant byte address 0x4 - core index']
  #allocation1 [shape = 'u32[72,128]{1,0:T(1,128)}', space=vmem, size = 0x9000, scoped, tag = 'internal scratch']
  %s0 = inlined_call_operand.vmem [shape: s32[16], index: 0, kind: input, shape index: {}]
  %s1 = inlined_call_operand.vmem [shape: f32[50,128], index: 1, kind: input, shape index: {}]
  %s2 = inlined_call_operand.vmem [shape: f32[152,128], index: 2, kind: input, shape index: {}]
  %s3 = inlined_call_operand.hbm [shape: f32[2,8], index: 3, kind: output, shape index: {}]
  %s4 = sld [smem:[#allocation0]]
  $region26: #{idraggn_forward.1} parent=0
    _
  %s6 = ssub.s32 1, %s4
  %s7 = scalar_select 0, %s6, %s4
  $region1: #{idraggn_forward.1} parent=0
    #allocation2 [shape = 'u8[512]{0}', space=smem, size = 0x200, scoped, tag = 'input window, operand 0, single buffered']
    #allocation3 [shape = 's32[1]{0}', space=sflag, size = 0x4, scoped, tag = 'scoped memory for idraggn_forward.1']
    #allocation4 [shape = 's32[1]{0}', space=sflag, size = 0x4, scoped, tag = 'scoped memory for idraggn_forward.1']
    #allocation5 [shape = 'u8[1024]{0}', space=vmem, size = 0x400, scoped, tag = 'output window, operand 0, single buffered']
    %8 = vsyncpa [#allocation4], 0
    %9 = vsyncpa [#allocation3], 0
    // Predicated region
    $region2: #{idraggn_forward.1} parent=1 // pred_check
      _
    $region3: #{idraggn_forward.1} parent=1 // pred_check_branch
      %11 = sbr.rel (0) target = $region5
    $region4: #{idraggn_forward.1} parent=1 // pred_region
      %13 = vsyncadd [#allocation4], 0
      %s15 = sshll.u32 %s0, 4
      %s16 = int_to_ptr.vmem [resolvable:$true] %s15
      %18 = dma.vmem_to_smem %s16, 16, [#allocation2], [#allocation4]
    $region5: #{idraggn_forward.1} parent=1 // pred_fallthru
      _
    // Predicated region
    $region6: #{idraggn_forward.1} parent=1 // pred_check
      _
    $region7: #{idraggn_forward.1} parent=1 // pred_check_branch
      %20 = sbr.rel (0) target = $region9
    $region8: #{idraggn_forward.1} parent=1 // pred_region
      _
    $region9: #{idraggn_forward.1} parent=1 // pred_fallthru
      _
    // Predicated region
    $region10: #{idraggn_forward.1} parent=1 // pred_check
      _
    $region11: #{idraggn_forward.1} parent=1 // pred_check_branch
      %22 = sbr.rel (0) target = $region13
    $region12: #{idraggn_forward.1} parent=1 // pred_region
      _
    $region13: #{idraggn_forward.1} parent=1 // pred_fallthru
      _
    // Predicated region
    $region14: #{idraggn_forward.1} parent=1 // pred_check
      _
    $region15: #{idraggn_forward.1} parent=1 // pred_check_branch
      %24 = sbr.rel (0) target = $region17
    $region16: #{idraggn_forward.1} parent=1 // pred_region
      %26 = dma.done [#allocation4], 16
    $region17: #{idraggn_forward.1} parent=1 // pred_fallthru
      _
    %27 = sfence
    %v28 = vld [vmem:[%s2] sm:$0xff]
    %v29 = vld [vmem:[%s2 + $0x8] sm:$0xff]
    %v30 = vld [vmem:[%s2 + $0x10] sm:$0xff]
    %v31 = vld [vmem:[%s2 + $0x18] sm:$0xff]
    %v32 = vld [vmem:[%s2 + $0x20] sm:$0xff]
    %v33 = vld [vmem:[%s2 + $0x28] sm:$0xff]
    %v34 = vld [vmem:[%s2 + $0x30] sm:$0xff]
    %v35 = vld [vmem:[%s2 + $0x38] sm:$0xff]
    %v36 = vld [vmem:[%s2 + $0x40] sm:$0xff]
    %v37 = vld [vmem:[%s2 + $0x48] sm:$0xff]
    %v38 = vld [vmem:[%s2 + $0x50] sm:$0xff]
    %v39 = vld [vmem:[%s2 + $0x58] sm:$0xff]
    %v40 = vld [vmem:[%s2 + $0x60] sm:$0xff]
    %v41 = vld [vmem:[%s2 + $0x68] sm:$0xff]
    %v42 = vld [vmem:[%s2 + $0x70] sm:$0xff]
    %v43 = vld [vmem:[%s2 + $0x78] sm:$0xff]
    %v44 = vld [vmem:[%s2 + $0x80] sm:$0x1]
    %v45 = vperm.slane %v44, 0
    %v46 = vld [vmem:[%s2 + $0x88] sm:$0x1]
    %v47 = vperm.slane %v46, 0
    %v48 = vld [vmem:[%s2 + $0x90] sm:$0x1]
    %s49 = sld [smem:[#allocation2]]
    %s50 = scalar_lea.vmem %s1, %s49
    %v51 = vld [vmem:[%s50] sm:$0x1]
    %s52 = sld [smem:[#allocation2 + $0x1]]
    %s53 = scalar_lea.vmem %s1, %s52
    %v54 = vld [vmem:[%s53] sm:$0x1]
    %v56 = vrot.slane %v54, 7
    %vm58 = vcmask 1040384
    %v59 = vsel %vm58, %v51, %v56
    %s60 = sld [smem:[#allocation2 + $0x2]]
    %s61 = scalar_lea.vmem %s1, %s60
    %v62 = vld [vmem:[%s61] sm:$0x1]
    %s63 = sld [smem:[#allocation2 + $0x3]]
    %s64 = scalar_lea.vmem %s1, %s63
    %v65 = vld [vmem:[%s64] sm:$0x1]
    %v67 = vrot.slane %v65, 7
    %v69 = vsel %vm58, %v62, %v67
    %s70 = sld [smem:[#allocation2 + $0x4]]
    %s71 = scalar_lea.vmem %s1, %s70
    %v72 = vld [vmem:[%s71] sm:$0x1]
    %s73 = sld [smem:[#allocation2 + $0x5]]
    %s74 = scalar_lea.vmem %s1, %s73
    %v75 = vld [vmem:[%s74] sm:$0x1]
    %v77 = vrot.slane %v75, 7
    %v79 = vsel %vm58, %v72, %v77
    %s80 = sld [smem:[#allocation2 + $0x6]]
    %s81 = scalar_lea.vmem %s1, %s80
    %v82 = vld [vmem:[%s81] sm:$0x1]
    %s83 = sld [smem:[#allocation2 + $0x7]]
    %s84 = scalar_lea.vmem %s1, %s83
    %v85 = vld [vmem:[%s84] sm:$0x1]
    %v87 = vrot.slane %v85, 7
    %v89 = vsel %vm58, %v82, %v87
    %s90 = sld [smem:[#allocation2 + $0x8]]
    %s91 = scalar_lea.vmem %s1, %s90
    %v92 = vld [vmem:[%s91] sm:$0x1]
    %s93 = sld [smem:[#allocation2 + $0x9]]
    %s94 = scalar_lea.vmem %s1, %s93
    %v95 = vld [vmem:[%s94] sm:$0x1]
    %v97 = vrot.slane %v95, 7
    %v99 = vsel %vm58, %v92, %v97
    %s100 = sld [smem:[#allocation2 + $0xa]]
    %s101 = scalar_lea.vmem %s1, %s100
    %v102 = vld [vmem:[%s101] sm:$0x1]
    %s103 = sld [smem:[#allocation2 + $0xb]]
    %s104 = scalar_lea.vmem %s1, %s103
    %v105 = vld [vmem:[%s104] sm:$0x1]
    %v107 = vrot.slane %v105, 7
    %v109 = vsel %vm58, %v102, %v107
    %s110 = sld [smem:[#allocation2 + $0xc]]
    %s111 = scalar_lea.vmem %s1, %s110
    %v112 = vld [vmem:[%s111] sm:$0x1]
    %s113 = sld [smem:[#allocation2 + $0xd]]
    %s114 = scalar_lea.vmem %s1, %s113
    %v115 = vld [vmem:[%s114] sm:$0x1]
    %v117 = vrot.slane %v115, 7
    %v119 = vsel %vm58, %v112, %v117
    %s120 = sld [smem:[#allocation2 + $0xe]]
    %s121 = scalar_lea.vmem %s1, %s120
    %v122 = vld [vmem:[%s121] sm:$0x1]
    %s123 = sld [smem:[#allocation2 + $0xf]]
    %s124 = scalar_lea.vmem %s1, %s123
    %v125 = vld [vmem:[%s124] sm:$0x1]
    %v127 = vrot.slane %v125, 7
    %v129 = vsel %vm58, %v122, %v127
    %vm130 = vcmask 261120
    %v132 = vsel %vm130, 0.0, 0
    %134 = vmatpush.msra.mxu0 0.0
    %135 = vmatpush.msra.mxu0 0.0
    %136 = vmatpush.msra.mxu0 0.0
    %137 = vmatpush.msra.mxu0 0.0
    %138 = vmatpush.msra.mxu0 0.0
    %139 = vmatpush.msra.mxu0 0.0
    %140 = vmatpush.msra.mxu0 0.0
    %141 = vmatpush.msra.mxu0 0.0
    %142 = vmatpush.msra.mxu0 0.0
    %143 = vmatpush.msra.mxu0 0.0
    %144 = vmatpush.msra.mxu0 0.0
    %145 = vmatpush.msra.mxu0 0.0
    %146 = vmatpush.msra.mxu0 %v31
    %147 = vmatpush.msra.mxu0 %v30
    %148 = vmatpush.msra.mxu0 %v29
    %149 = vmatpush.msra.mxu0 %v28
    %150 = vmatmul.f32.gmra.mxu0 %v132
    %v151 = vpop.f32.mrf.mxu0
    %v152 = vadd.f32 %v45, %v151
    %153 = vdwg.mxu0
    %v154 = vadd.f32 %v59, %v152
    %v155 = vxor.u32 %v154, 2147483648
    %v156 = vmul.f32 %v155, 1.442695
    %v157 = vpow.pop %v156
    %v158 = vadd.f32 %v157, 1.0
    %v159 = vrcp.pop %v158
    %v160 = vmul.f32 %v158, %v159
    %v161 = vsub.f32 1.0, %v160
    %v162 = vmul.f32 %v159, %v161
    %v163 = vadd.f32 %v159, %v162
    %vm164 = vweird.f32 %v158
    %vm165 = vweird.f32 %v159
    %vm166 = vmor %vm164, %vm165
    %v167 = vsel %vm166, %v159, %v163
    %v168 = vand.u32 2147483647, %v158
    %vm169 = vcmp.eq.f32.partialorder %v168, 8.507059e+37
    %v170 = vand.u32 %v158, 2147483648
    %v171 = vor.u32 1.1754944e-38, %v170
    %v172 = vsel %vm169, %v171, %v167
    %v173 = vmul.f32 1.0, %v172
    %175 = vrot.lane.b32.xlu0 %v152, 64
    %v176 = vpop.permute.xlu0 %175
    %v178 = vmul.f32 %v173, %v176
    %180 = vrot.lane.b32.xlu0 %v178, 64
    %v181 = vpop.permute.xlu0 %180
    %v183 = vadd.f32 %v59, %v181
    %v184 = vtanh.pop %v183
    %v185 = vsub.f32 1.0, %v173
    %187 = vrot.lane.b32.xlu0 %v184, 96
    %v188 = vpop.permute.xlu0 %187
    %v190 = vmul.f32 %v185, %v188
    %v191 = vmul.f32 %v173, 0.0
    %v192 = vadd.f32 %v190, %v191
    %193 = vmatpush.msra.mxu0 0.0
    %194 = vmatpush.msra.mxu0 0.0
    %195 = vmatpush.msra.mxu0 0.0
    %196 = vmatpush.msra.mxu0 0.0
    %197 = vmatpush.msra.mxu0 0.0
    %198 = vmatpush.msra.mxu0 0.0
    %199 = vmatpush.msra.mxu0 0.0
    %200 = vmatpush.msra.mxu0 0.0
    %201 = vmatpush.msra.mxu0 0.0
    %202 = vmatpush.msra.mxu0 0.0
    %203 = vmatpush.msra.mxu0 0.0
    %204 = vmatpush.msra.mxu0 0.0
    %205 = vmatpush.msra.mxu0 %v39
    %206 = vmatpush.msra.mxu0 %v38
    %207 = vmatpush.msra.mxu0 %v37
    %208 = vmatpush.msra.mxu0 %v36
    %209 = vmatmul.f32.gmra.mxu0 %v132
    %v210 = vpop.f32.mrf.mxu0
    %v211 = vadd.f32 0.0, %v210
    %212 = vdwg.mxu0
    %214 = vrot.lane.b32.xlu0 %v192, 96
    %v215 = vpop.permute.xlu0 %214
    %v216 = vsel %vm130, %v215, 0
    %218 = vmatpush.msra.mxu0 0.0
    %219 = vmatpush.msra.mxu0 0.0
    %220 = vmatpush.msra.mxu0 0.0
    %221 = vmatpush.msra.mxu0 0.0
    %222 = vmatpush.msra.mxu0 0.0
    %223 = vmatpush.msra.mxu0 0.0
    %224 = vmatpush.msra.mxu0 0.0
    %225 = vmatpush.msra.mxu0 0.0
    %226 = vmatpush.msra.mxu0 0.0
    %227 = vmatpush.msra.mxu0 0.0
    %228 = vmatpush.msra.mxu0 0.0
    %229 = vmatpush.msra.mxu0 0.0
    %230 = vmatpush.msra.mxu0 %v35
    %231 = vmatpush.msra.mxu0 %v34
    %232 = vmatpush.msra.mxu0 %v33
    %233 = vmatpush.msra.mxu0 %v32
    %234 = vmatmul.f32.gmra.mxu0 %v216
    %v235 = vpop.f32.mrf.mxu0
    %v236 = vadd.f32 %v211, %v235
    %237 = vdwg.mxu0
    %v238 = vadd.f32 %v236, %v47
    %v239 = vxor.u32 %v238, 2147483648
    %v240 = vmul.f32 %v239, 1.442695
    %v241 = vpow.pop %v240
    %v242 = vadd.f32 %v241, 1.0
    %v243 = vrcp.pop %v242
    %v244 = vmul.f32 %v242, %v243
    %v245 = vsub.f32 1.0, %v244
    %v246 = vmul.f32 %v243, %v245
    %v247 = vadd.f32 %v243, %v246
    %vm248 = vweird.f32 %v242
    %vm249 = vweird.f32 %v243
    %vm250 = vmor %vm248, %vm249
    %v251 = vsel %vm250, %v243, %v247
    %v252 = vand.u32 2147483647, %v242
    %vm253 = vcmp.eq.f32.partialorder %v252, 8.507059e+37
    %v254 = vand.u32 %v242, 2147483648
    %v255 = vor.u32 1.1754944e-38, %v254
    %v256 = vsel %vm253, %v255, %v251
    %v257 = vmul.f32 1.0, %v256
    %259 = vrot.lane.b32.xlu0 %v238, 32
    %v260 = vpop.permute.xlu0 %259
    %v262 = vmul.f32 %v257, %v260
    %264 = vrot.lane.b32.xlu0 %v262, 64
    %v265 = vpop.permute.xlu0 %264
    %v267 = vadd.f32 %v238, %v265
    %v268 = vtanh.pop %v267
    %v269 = vsub.f32 1.0, %v257
    %271 = vrot.lane.b32.xlu0 %v268, 96
    %v272 = vpop.permute.xlu0 %271
    %v274 = vmul.f32 %v269, %v272
    %v275 = vmul.f32 %v257, 0.0
    %v276 = vadd.f32 %v274, %v275
    %277 = vmatpush.msra.mxu0 0.0
    %278 = vmatpush.msra.mxu0 0.0
    %279 = vmatpush.msra.mxu0 0.0
    %280 = vmatpush.msra.mxu0 0.0
    %281 = vmatpush.msra.mxu0 0.0
    %282 = vmatpush.msra.mxu0 0.0
    %283 = vmatpush.msra.mxu0 0.0
    %284 = vmatpush.msra.mxu0 0.0
    %285 = vmatpush.msra.mxu0 0.0
    %286 = vmatpush.msra.mxu0 0.0
    %287 = vmatpush.msra.mxu0 0.0
    %288 = vmatpush.msra.mxu0 0.0
    %289 = vmatpush.msra.mxu0 %v31
    %290 = vmatpush.msra.mxu0 %v30
    %291 = vmatpush.msra.mxu0 %v29
    %292 = vmatpush.msra.mxu0 %v28
    %293 = vmatmul.f32.gmra.mxu0 %v216
    %v294 = vpop.f32.mrf.mxu0
    %v295 = vadd.f32 %v45, %v294
    %296 = vdwg.mxu0
    %v297 = vadd.f32 %v69, %v295
    %v298 = vxor.u32 %v297, 2147483648
    %v299 = vmul.f32 %v298, 1.442695
    %v300 = vpow.pop %v299
    %v301 = vadd.f32 %v300, 1.0
    %v302 = vrcp.pop %v301
    %v303 = vmul.f32 %v301, %v302
    %v304 = vsub.f32 1.0, %v303
    %v305 = vmul.f32 %v302, %v304
    %v306 = vadd.f32 %v302, %v305
    %vm307 = vweird.f32 %v301
    %vm308 = vweird.f32 %v302
    %vm309 = vmor %vm307, %vm308
    %v310 = vsel %vm309, %v302, %v306
    %v311 = vand.u32 2147483647, %v301
    %vm312 = vcmp.eq.f32.partialorder %v311, 8.507059e+37
    %v313 = vand.u32 %v301, 2147483648
    %v314 = vor.u32 1.1754944e-38, %v313
    %v315 = vsel %vm312, %v314, %v310
    %v316 = vmul.f32 1.0, %v315
    %318 = vrot.lane.b32.xlu0 %v295, 64
    %v319 = vpop.permute.xlu0 %318
    %v321 = vmul.f32 %v316, %v319
    %323 = vrot.lane.b32.xlu0 %v321, 64
    %v324 = vpop.permute.xlu0 %323
    %v326 = vadd.f32 %v69, %v324
    %v327 = vtanh.pop %v326
    %v328 = vsub.f32 1.0, %v316
    %330 = vrot.lane.b32.xlu0 %v327, 96
    %v331 = vpop.permute.xlu0 %330
    %v333 = vmul.f32 %v328, %v331
    %v334 = vmul.f32 %v316, %v192
    %v335 = vadd.f32 %v333, %v334
    %337 = vrot.lane.b32.xlu0 %v276, 96
    %v338 = vpop.permute.xlu0 %337
    %v339 = vsel %vm130, %v338, 0
    %341 = vmatpush.msra.mxu0 0.0
    %342 = vmatpush.msra.mxu0 0.0
    %343 = vmatpush.msra.mxu0 0.0
    %344 = vmatpush.msra.mxu0 0.0
    %345 = vmatpush.msra.mxu0 0.0
    %346 = vmatpush.msra.mxu0 0.0
    %347 = vmatpush.msra.mxu0 0.0
    %348 = vmatpush.msra.mxu0 0.0
    %349 = vmatpush.msra.mxu0 0.0
    %350 = vmatpush.msra.mxu0 0.0
    %351 = vmatpush.msra.mxu0 0.0
    %352 = vmatpush.msra.mxu0 0.0
    %353 = vmatpush.msra.mxu0 %v39
    %354 = vmatpush.msra.mxu0 %v38
    %355 = vmatpush.msra.mxu0 %v37
    %356 = vmatpush.msra.mxu0 %v36
    %357 = vmatmul.f32.gmra.mxu0 %v339
    %v358 = vpop.f32.mrf.mxu0
    %v359 = vadd.f32 0.0, %v358
    %360 = vdwg.mxu0
    %362 = vrot.lane.b32.xlu0 %v335, 96
    %v363 = vpop.permute.xlu0 %362
    %v364 = vsel %vm130, %v363, 0
    %366 = vmatpush.msra.mxu0 0.0
    %367 = vmatpush.msra.mxu0 0.0
    %368 = vmatpush.msra.mxu0 0.0
    %369 = vmatpush.msra.mxu0 0.0
    %370 = vmatpush.msra.mxu0 0.0
    %371 = vmatpush.msra.mxu0 0.0
    %372 = vmatpush.msra.mxu0 0.0
    %373 = vmatpush.msra.mxu0 0.0
    %374 = vmatpush.msra.mxu0 0.0
    %375 = vmatpush.msra.mxu0 0.0
    %376 = vmatpush.msra.mxu0 0.0
    %377 = vmatpush.msra.mxu0 0.0
    %378 = vmatpush.msra.mxu0 %v35
    %379 = vmatpush.msra.mxu0 %v34
    %380 = vmatpush.msra.mxu0 %v33
    %381 = vmatpush.msra.mxu0 %v32
    %382 = vmatmul.f32.gmra.mxu0 %v364
    %v383 = vpop.f32.mrf.mxu0
    %v384 = vadd.f32 %v359, %v383
    %385 = vdwg.mxu0
    %v386 = vadd.f32 %v384, %v47
    %v387 = vxor.u32 %v386, 2147483648
    %v388 = vmul.f32 %v387, 1.442695
    %v389 = vpow.pop %v388
    %v390 = vadd.f32 %v389, 1.0
    %v391 = vrcp.pop %v390
    %v392 = vmul.f32 %v390, %v391
    %v393 = vsub.f32 1.0, %v392
    %v394 = vmul.f32 %v391, %v393
    %v395 = vadd.f32 %v391, %v394
    %vm396 = vweird.f32 %v390
    %vm397 = vweird.f32 %v391
    %vm398 = vmor %vm396, %vm397
    %v399 = vsel %vm398, %v391, %v395
    %v400 = vand.u32 2147483647, %v390
    %vm401 = vcmp.eq.f32.partialorder %v400, 8.507059e+37
    %v402 = vand.u32 %v390, 2147483648
    %v403 = vor.u32 1.1754944e-38, %v402
    %v404 = vsel %vm401, %v403, %v399
    %v405 = vmul.f32 1.0, %v404
    %407 = vrot.lane.b32.xlu0 %v386, 32
    %v408 = vpop.permute.xlu0 %407
    %v410 = vmul.f32 %v405, %v408
    %412 = vrot.lane.b32.xlu0 %v410, 64
    %v413 = vpop.permute.xlu0 %412
    %v415 = vadd.f32 %v386, %v413
    %v416 = vtanh.pop %v415
    %v417 = vsub.f32 1.0, %v405
    %419 = vrot.lane.b32.xlu0 %v416, 96
    %v420 = vpop.permute.xlu0 %419
    %v422 = vmul.f32 %v417, %v420
    %v423 = vmul.f32 %v405, %v276
    %v424 = vadd.f32 %v422, %v423
    %425 = vmatpush.msra.mxu0 0.0
    %426 = vmatpush.msra.mxu0 0.0
    %427 = vmatpush.msra.mxu0 0.0
    %428 = vmatpush.msra.mxu0 0.0
    %429 = vmatpush.msra.mxu0 0.0
    %430 = vmatpush.msra.mxu0 0.0
    %431 = vmatpush.msra.mxu0 0.0
    %432 = vmatpush.msra.mxu0 0.0
    %433 = vmatpush.msra.mxu0 0.0
    %434 = vmatpush.msra.mxu0 0.0
    %435 = vmatpush.msra.mxu0 0.0
    %436 = vmatpush.msra.mxu0 0.0
    %437 = vmatpush.msra.mxu0 %v31
    %438 = vmatpush.msra.mxu0 %v30
    %439 = vmatpush.msra.mxu0 %v29
    %440 = vmatpush.msra.mxu0 %v28
    %441 = vmatmul.f32.gmra.mxu0 %v364
    %v442 = vpop.f32.mrf.mxu0
    %v443 = vadd.f32 %v45, %v442
    %444 = vdwg.mxu0
    %v445 = vadd.f32 %v79, %v443
    %v446 = vxor.u32 %v445, 2147483648
    %v447 = vmul.f32 %v446, 1.442695
    %v448 = vpow.pop %v447
    %v449 = vadd.f32 %v448, 1.0
    %v450 = vrcp.pop %v449
    %v451 = vmul.f32 %v449, %v450
    %v452 = vsub.f32 1.0, %v451
    %v453 = vmul.f32 %v450, %v452
    %v454 = vadd.f32 %v450, %v453
    %vm455 = vweird.f32 %v449
    %vm456 = vweird.f32 %v450
    %vm457 = vmor %vm455, %vm456
    %v458 = vsel %vm457, %v450, %v454
    %v459 = vand.u32 2147483647, %v449
    %vm460 = vcmp.eq.f32.partialorder %v459, 8.507059e+37
    %v461 = vand.u32 %v449, 2147483648
    %v462 = vor.u32 1.1754944e-38, %v461
    %v463 = vsel %vm460, %v462, %v458
    %v464 = vmul.f32 1.0, %v463
    %466 = vrot.lane.b32.xlu0 %v443, 64
    %v467 = vpop.permute.xlu0 %466
    %v469 = vmul.f32 %v464, %v467
    %471 = vrot.lane.b32.xlu0 %v469, 64
    %v472 = vpop.permute.xlu0 %471
    %v474 = vadd.f32 %v79, %v472
    %v475 = vtanh.pop %v474
    %v476 = vsub.f32 1.0, %v464
    %478 = vrot.lane.b32.xlu0 %v475, 96
    %v479 = vpop.permute.xlu0 %478
    %v481 = vmul.f32 %v476, %v479
    %v482 = vmul.f32 %v464, %v335
    %v483 = vadd.f32 %v481, %v482
    %485 = vrot.lane.b32.xlu0 %v424, 96
    %v486 = vpop.permute.xlu0 %485
    %v487 = vsel %vm130, %v486, 0
    %489 = vmatpush.msra.mxu0 0.0
    %490 = vmatpush.msra.mxu0 0.0
    %491 = vmatpush.msra.mxu0 0.0
    %492 = vmatpush.msra.mxu0 0.0
    %493 = vmatpush.msra.mxu0 0.0
    %494 = vmatpush.msra.mxu0 0.0
    %495 = vmatpush.msra.mxu0 0.0
    %496 = vmatpush.msra.mxu0 0.0
    %497 = vmatpush.msra.mxu0 0.0
    %498 = vmatpush.msra.mxu0 0.0
    %499 = vmatpush.msra.mxu0 0.0
    %500 = vmatpush.msra.mxu0 0.0
    %501 = vmatpush.msra.mxu0 %v39
    %502 = vmatpush.msra.mxu0 %v38
    %503 = vmatpush.msra.mxu0 %v37
    %504 = vmatpush.msra.mxu0 %v36
    %505 = vmatmul.f32.gmra.mxu0 %v487
    %v506 = vpop.f32.mrf.mxu0
    %v507 = vadd.f32 0.0, %v506
    %508 = vdwg.mxu0
    %510 = vrot.lane.b32.xlu0 %v483, 96
    %v511 = vpop.permute.xlu0 %510
    %v512 = vsel %vm130, %v511, 0
    %514 = vmatpush.msra.mxu0 0.0
    %515 = vmatpush.msra.mxu0 0.0
    %516 = vmatpush.msra.mxu0 0.0
    %517 = vmatpush.msra.mxu0 0.0
    %518 = vmatpush.msra.mxu0 0.0
    %519 = vmatpush.msra.mxu0 0.0
    %520 = vmatpush.msra.mxu0 0.0
    %521 = vmatpush.msra.mxu0 0.0
    %522 = vmatpush.msra.mxu0 0.0
    %523 = vmatpush.msra.mxu0 0.0
    %524 = vmatpush.msra.mxu0 0.0
    %525 = vmatpush.msra.mxu0 0.0
    %526 = vmatpush.msra.mxu0 %v35
    %527 = vmatpush.msra.mxu0 %v34
    %528 = vmatpush.msra.mxu0 %v33
    %529 = vmatpush.msra.mxu0 %v32
    %530 = vmatmul.f32.gmra.mxu0 %v512
    %v531 = vpop.f32.mrf.mxu0
    %v532 = vadd.f32 %v507, %v531
    %533 = vdwg.mxu0
    %v534 = vadd.f32 %v532, %v47
    %v535 = vxor.u32 %v534, 2147483648
    %v536 = vmul.f32 %v535, 1.442695
    %v537 = vpow.pop %v536
    %v538 = vadd.f32 %v537, 1.0
    %v539 = vrcp.pop %v538
    %v540 = vmul.f32 %v538, %v539
    %v541 = vsub.f32 1.0, %v540
    %v542 = vmul.f32 %v539, %v541
    %v543 = vadd.f32 %v539, %v542
    %vm544 = vweird.f32 %v538
    %vm545 = vweird.f32 %v539
    %vm546 = vmor %vm544, %vm545
    %v547 = vsel %vm546, %v539, %v543
    %v548 = vand.u32 2147483647, %v538
    %vm549 = vcmp.eq.f32.partialorder %v548, 8.507059e+37
    %v550 = vand.u32 %v538, 2147483648
    %v551 = vor.u32 1.1754944e-38, %v550
    %v552 = vsel %vm549, %v551, %v547
    %v553 = vmul.f32 1.0, %v552
    %555 = vrot.lane.b32.xlu0 %v534, 32
    %v556 = vpop.permute.xlu0 %555
    %v558 = vmul.f32 %v553, %v556
    %560 = vrot.lane.b32.xlu0 %v558, 64
    %v561 = vpop.permute.xlu0 %560
    %v563 = vadd.f32 %v534, %v561
    %v564 = vtanh.pop %v563
    %v565 = vsub.f32 1.0, %v553
    %567 = vrot.lane.b32.xlu0 %v564, 96
    %v568 = vpop.permute.xlu0 %567
    %v570 = vmul.f32 %v565, %v568
    %v571 = vmul.f32 %v553, %v424
    %v572 = vadd.f32 %v570, %v571
    %573 = vmatpush.msra.mxu0 0.0
    %574 = vmatpush.msra.mxu0 0.0
    %575 = vmatpush.msra.mxu0 0.0
    %576 = vmatpush.msra.mxu0 0.0
    %577 = vmatpush.msra.mxu0 0.0
    %578 = vmatpush.msra.mxu0 0.0
    %579 = vmatpush.msra.mxu0 0.0
    %580 = vmatpush.msra.mxu0 0.0
    %581 = vmatpush.msra.mxu0 0.0
    %582 = vmatpush.msra.mxu0 0.0
    %583 = vmatpush.msra.mxu0 0.0
    %584 = vmatpush.msra.mxu0 0.0
    %585 = vmatpush.msra.mxu0 %v31
    %586 = vmatpush.msra.mxu0 %v30
    %587 = vmatpush.msra.mxu0 %v29
    %588 = vmatpush.msra.mxu0 %v28
    %589 = vmatmul.f32.gmra.mxu0 %v512
    %v590 = vpop.f32.mrf.mxu0
    %v591 = vadd.f32 %v45, %v590
    %592 = vdwg.mxu0
    %v593 = vadd.f32 %v89, %v591
    %v594 = vxor.u32 %v593, 2147483648
    %v595 = vmul.f32 %v594, 1.442695
    %v596 = vpow.pop %v595
    %v597 = vadd.f32 %v596, 1.0
    %v598 = vrcp.pop %v597
    %v599 = vmul.f32 %v597, %v598
    %v600 = vsub.f32 1.0, %v599
    %v601 = vmul.f32 %v598, %v600
    %v602 = vadd.f32 %v598, %v601
    %vm603 = vweird.f32 %v597
    %vm604 = vweird.f32 %v598
    %vm605 = vmor %vm603, %vm604
    %v606 = vsel %vm605, %v598, %v602
    %v607 = vand.u32 2147483647, %v597
    %vm608 = vcmp.eq.f32.partialorder %v607, 8.507059e+37
    %v609 = vand.u32 %v597, 2147483648
    %v610 = vor.u32 1.1754944e-38, %v609
    %v611 = vsel %vm608, %v610, %v606
    %v612 = vmul.f32 1.0, %v611
    %614 = vrot.lane.b32.xlu0 %v591, 64
    %v615 = vpop.permute.xlu0 %614
    %v617 = vmul.f32 %v612, %v615
    %619 = vrot.lane.b32.xlu0 %v617, 64
    %v620 = vpop.permute.xlu0 %619
    %v622 = vadd.f32 %v89, %v620
    %v623 = vtanh.pop %v622
    %v624 = vsub.f32 1.0, %v612
    %626 = vrot.lane.b32.xlu0 %v623, 96
    %v627 = vpop.permute.xlu0 %626
    %v629 = vmul.f32 %v624, %v627
    %v630 = vmul.f32 %v612, %v483
    %v631 = vadd.f32 %v629, %v630
    %633 = vrot.lane.b32.xlu0 %v572, 96
    %v634 = vpop.permute.xlu0 %633
    %v635 = vsel %vm130, %v634, 0
    %637 = vmatpush.msra.mxu0 0.0
    %638 = vmatpush.msra.mxu0 0.0
    %639 = vmatpush.msra.mxu0 0.0
    %640 = vmatpush.msra.mxu0 0.0
    %641 = vmatpush.msra.mxu0 0.0
    %642 = vmatpush.msra.mxu0 0.0
    %643 = vmatpush.msra.mxu0 0.0
    %644 = vmatpush.msra.mxu0 0.0
    %645 = vmatpush.msra.mxu0 0.0
    %646 = vmatpush.msra.mxu0 0.0
    %647 = vmatpush.msra.mxu0 0.0
    %648 = vmatpush.msra.mxu0 0.0
    %649 = vmatpush.msra.mxu0 %v39
    %650 = vmatpush.msra.mxu0 %v38
    %651 = vmatpush.msra.mxu0 %v37
    %652 = vmatpush.msra.mxu0 %v36
    %653 = vmatmul.f32.gmra.mxu0 %v635
    %v654 = vpop.f32.mrf.mxu0
    %v655 = vadd.f32 0.0, %v654
    %656 = vdwg.mxu0
    %658 = vrot.lane.b32.xlu0 %v631, 96
    %v659 = vpop.permute.xlu0 %658
    %v660 = vsel %vm130, %v659, 0
    %662 = vmatpush.msra.mxu0 0.0
    %663 = vmatpush.msra.mxu0 0.0
    %664 = vmatpush.msra.mxu0 0.0
    %665 = vmatpush.msra.mxu0 0.0
    %666 = vmatpush.msra.mxu0 0.0
    %667 = vmatpush.msra.mxu0 0.0
    %668 = vmatpush.msra.mxu0 0.0
    %669 = vmatpush.msra.mxu0 0.0
    %670 = vmatpush.msra.mxu0 0.0
    %671 = vmatpush.msra.mxu0 0.0
    %672 = vmatpush.msra.mxu0 0.0
    %673 = vmatpush.msra.mxu0 0.0
    %674 = vmatpush.msra.mxu0 %v35
    %675 = vmatpush.msra.mxu0 %v34
    %676 = vmatpush.msra.mxu0 %v33
    %677 = vmatpush.msra.mxu0 %v32
    %678 = vmatmul.f32.gmra.mxu0 %v660
    %v679 = vpop.f32.mrf.mxu0
    %v680 = vadd.f32 %v655, %v679
    %681 = vdwg.mxu0
    %v682 = vadd.f32 %v680, %v47
    %v683 = vxor.u32 %v682, 2147483648
    %v684 = vmul.f32 %v683, 1.442695
    %v685 = vpow.pop %v684
    %v686 = vadd.f32 %v685, 1.0
    %v687 = vrcp.pop %v686
    %v688 = vmul.f32 %v686, %v687
    %v689 = vsub.f32 1.0, %v688
    %v690 = vmul.f32 %v687, %v689
    %v691 = vadd.f32 %v687, %v690
    %vm692 = vweird.f32 %v686
    %vm693 = vweird.f32 %v687
    %vm694 = vmor %vm692, %vm693
    %v695 = vsel %vm694, %v687, %v691
    %v696 = vand.u32 2147483647, %v686
    %vm697 = vcmp.eq.f32.partialorder %v696, 8.507059e+37
    %v698 = vand.u32 %v686, 2147483648
    %v699 = vor.u32 1.1754944e-38, %v698
    %v700 = vsel %vm697, %v699, %v695
    %v701 = vmul.f32 1.0, %v700
    %703 = vrot.lane.b32.xlu0 %v682, 32
    %v704 = vpop.permute.xlu0 %703
    %v706 = vmul.f32 %v701, %v704
    %708 = vrot.lane.b32.xlu0 %v706, 64
    %v709 = vpop.permute.xlu0 %708
    %v711 = vadd.f32 %v682, %v709
    %v712 = vtanh.pop %v711
    %v713 = vsub.f32 1.0, %v701
    %715 = vrot.lane.b32.xlu0 %v712, 96
    %v716 = vpop.permute.xlu0 %715
    %v718 = vmul.f32 %v713, %v716
    %v719 = vmul.f32 %v701, %v572
    %v720 = vadd.f32 %v718, %v719
    %721 = vmatpush.msra.mxu0 0.0
    %722 = vmatpush.msra.mxu0 0.0
    %723 = vmatpush.msra.mxu0 0.0
    %724 = vmatpush.msra.mxu0 0.0
    %725 = vmatpush.msra.mxu0 0.0
    %726 = vmatpush.msra.mxu0 0.0
    %727 = vmatpush.msra.mxu0 0.0
    %728 = vmatpush.msra.mxu0 0.0
    %729 = vmatpush.msra.mxu0 0.0
    %730 = vmatpush.msra.mxu0 0.0
    %731 = vmatpush.msra.mxu0 0.0
    %732 = vmatpush.msra.mxu0 0.0
    %733 = vmatpush.msra.mxu0 %v31
    %734 = vmatpush.msra.mxu0 %v30
    %735 = vmatpush.msra.mxu0 %v29
    %736 = vmatpush.msra.mxu0 %v28
    %737 = vmatmul.f32.gmra.mxu0 %v660
    %v738 = vpop.f32.mrf.mxu0
    %v739 = vadd.f32 %v45, %v738
    %740 = vdwg.mxu0
    %v741 = vadd.f32 %v99, %v739
    %v742 = vxor.u32 %v741, 2147483648
    %v743 = vmul.f32 %v742, 1.442695
    %v744 = vpow.pop %v743
    %v745 = vadd.f32 %v744, 1.0
    %v746 = vrcp.pop %v745
    %v747 = vmul.f32 %v745, %v746
    %v748 = vsub.f32 1.0, %v747
    %v749 = vmul.f32 %v746, %v748
    %v750 = vadd.f32 %v746, %v749
    %vm751 = vweird.f32 %v745
    %vm752 = vweird.f32 %v746
    %vm753 = vmor %vm751, %vm752
    %v754 = vsel %vm753, %v746, %v750
    %v755 = vand.u32 2147483647, %v745
    %vm756 = vcmp.eq.f32.partialorder %v755, 8.507059e+37
    %v757 = vand.u32 %v745, 2147483648
    %v758 = vor.u32 1.1754944e-38, %v757
    %v759 = vsel %vm756, %v758, %v754
    %v760 = vmul.f32 1.0, %v759
    %762 = vrot.lane.b32.xlu0 %v739, 64
    %v763 = vpop.permute.xlu0 %762
    %v765 = vmul.f32 %v760, %v763
    %767 = vrot.lane.b32.xlu0 %v765, 64
    %v768 = vpop.permute.xlu0 %767
    %v770 = vadd.f32 %v99, %v768
    %v771 = vtanh.pop %v770
    %v772 = vsub.f32 1.0, %v760
    %774 = vrot.lane.b32.xlu0 %v771, 96
    %v775 = vpop.permute.xlu0 %774
    %v777 = vmul.f32 %v772, %v775
    %v778 = vmul.f32 %v760, %v631
    %v779 = vadd.f32 %v777, %v778
    %781 = vrot.lane.b32.xlu0 %v720, 96
    %v782 = vpop.permute.xlu0 %781
    %v783 = vsel %vm130, %v782, 0
    %785 = vmatpush.msra.mxu0 0.0
    %786 = vmatpush.msra.mxu0 0.0
    %787 = vmatpush.msra.mxu0 0.0
    %788 = vmatpush.msra.mxu0 0.0
    %789 = vmatpush.msra.mxu0 0.0
    %790 = vmatpush.msra.mxu0 0.0
    %791 = vmatpush.msra.mxu0 0.0
    %792 = vmatpush.msra.mxu0 0.0
    %793 = vmatpush.msra.mxu0 0.0
    %794 = vmatpush.msra.mxu0 0.0
    %795 = vmatpush.msra.mxu0 0.0
    %796 = vmatpush.msra.mxu0 0.0
    %797 = vmatpush.msra.mxu0 %v39
    %798 = vmatpush.msra.mxu0 %v38
    %799 = vmatpush.msra.mxu0 %v37
    %800 = vmatpush.msra.mxu0 %v36
    %801 = vmatmul.f32.gmra.mxu0 %v783
    %v802 = vpop.f32.mrf.mxu0
    %v803 = vadd.f32 0.0, %v802
    %804 = vdwg.mxu0
    %806 = vrot.lane.b32.xlu0 %v779, 96
    %v807 = vpop.permute.xlu0 %806
    %v808 = vsel %vm130, %v807, 0
    %810 = vmatpush.msra.mxu0 0.0
    %811 = vmatpush.msra.mxu0 0.0
    %812 = vmatpush.msra.mxu0 0.0
    %813 = vmatpush.msra.mxu0 0.0
    %814 = vmatpush.msra.mxu0 0.0
    %815 = vmatpush.msra.mxu0 0.0
    %816 = vmatpush.msra.mxu0 0.0
    %817 = vmatpush.msra.mxu0 0.0
    %818 = vmatpush.msra.mxu0 0.0
    %819 = vmatpush.msra.mxu0 0.0
    %820 = vmatpush.msra.mxu0 0.0
    %821 = vmatpush.msra.mxu0 0.0
    %822 = vmatpush.msra.mxu0 %v35
    %823 = vmatpush.msra.mxu0 %v34
    %824 = vmatpush.msra.mxu0 %v33
    %825 = vmatpush.msra.mxu0 %v32
    %826 = vmatmul.f32.gmra.mxu0 %v808
    %v827 = vpop.f32.mrf.mxu0
    %v828 = vadd.f32 %v803, %v827
    %829 = vdwg.mxu0
    %v830 = vadd.f32 %v828, %v47
    %v831 = vxor.u32 %v830, 2147483648
    %v832 = vmul.f32 %v831, 1.442695
    %v833 = vpow.pop %v832
    %v834 = vadd.f32 %v833, 1.0
    %v835 = vrcp.pop %v834
    %v836 = vmul.f32 %v834, %v835
    %v837 = vsub.f32 1.0, %v836
    %v838 = vmul.f32 %v835, %v837
    %v839 = vadd.f32 %v835, %v838
    %vm840 = vweird.f32 %v834
    %vm841 = vweird.f32 %v835
    %vm842 = vmor %vm840, %vm841
    %v843 = vsel %vm842, %v835, %v839
    %v844 = vand.u32 2147483647, %v834
    %vm845 = vcmp.eq.f32.partialorder %v844, 8.507059e+37
    %v846 = vand.u32 %v834, 2147483648
    %v847 = vor.u32 1.1754944e-38, %v846
    %v848 = vsel %vm845, %v847, %v843
    %v849 = vmul.f32 1.0, %v848
    %851 = vrot.lane.b32.xlu0 %v830, 32
    %v852 = vpop.permute.xlu0 %851
    %v854 = vmul.f32 %v849, %v852
    %856 = vrot.lane.b32.xlu0 %v854, 64
    %v857 = vpop.permute.xlu0 %856
    %v859 = vadd.f32 %v830, %v857
    %v860 = vtanh.pop %v859
    %v861 = vsub.f32 1.0, %v849
    %863 = vrot.lane.b32.xlu0 %v860, 96
    %v864 = vpop.permute.xlu0 %863
    %v866 = vmul.f32 %v861, %v864
    %v867 = vmul.f32 %v849, %v720
    %v868 = vadd.f32 %v866, %v867
    %869 = vmatpush.msra.mxu0 0.0
    %870 = vmatpush.msra.mxu0 0.0
    %871 = vmatpush.msra.mxu0 0.0
    %872 = vmatpush.msra.mxu0 0.0
    %873 = vmatpush.msra.mxu0 0.0
    %874 = vmatpush.msra.mxu0 0.0
    %875 = vmatpush.msra.mxu0 0.0
    %876 = vmatpush.msra.mxu0 0.0
    %877 = vmatpush.msra.mxu0 0.0
    %878 = vmatpush.msra.mxu0 0.0
    %879 = vmatpush.msra.mxu0 0.0
    %880 = vmatpush.msra.mxu0 0.0
    %881 = vmatpush.msra.mxu0 %v31
    %882 = vmatpush.msra.mxu0 %v30
    %883 = vmatpush.msra.mxu0 %v29
    %884 = vmatpush.msra.mxu0 %v28
    %885 = vmatmul.f32.gmra.mxu0 %v808
    %v886 = vpop.f32.mrf.mxu0
    %v887 = vadd.f32 %v45, %v886
    %888 = vdwg.mxu0
    %v889 = vadd.f32 %v109, %v887
    %v890 = vxor.u32 %v889, 2147483648
    %v891 = vmul.f32 %v890, 1.442695
    %v892 = vpow.pop %v891
    %v893 = vadd.f32 %v892, 1.0
    %v894 = vrcp.pop %v893
    %v895 = vmul.f32 %v893, %v894
    %v896 = vsub.f32 1.0, %v895
    %v897 = vmul.f32 %v894, %v896
    %v898 = vadd.f32 %v894, %v897
    %vm899 = vweird.f32 %v893
    %vm900 = vweird.f32 %v894
    %vm901 = vmor %vm899, %vm900
    %v902 = vsel %vm901, %v894, %v898
    %v903 = vand.u32 2147483647, %v893
    %vm904 = vcmp.eq.f32.partialorder %v903, 8.507059e+37
    %v905 = vand.u32 %v893, 2147483648
    %v906 = vor.u32 1.1754944e-38, %v905
    %v907 = vsel %vm904, %v906, %v902
    %v908 = vmul.f32 1.0, %v907
    %910 = vrot.lane.b32.xlu0 %v887, 64
    %v911 = vpop.permute.xlu0 %910
    %v913 = vmul.f32 %v908, %v911
    %915 = vrot.lane.b32.xlu0 %v913, 64
    %v916 = vpop.permute.xlu0 %915
    %v918 = vadd.f32 %v109, %v916
    %v919 = vtanh.pop %v918
    %v920 = vsub.f32 1.0, %v908
    %922 = vrot.lane.b32.xlu0 %v919, 96
    %v923 = vpop.permute.xlu0 %922
    %v925 = vmul.f32 %v920, %v923
    %v926 = vmul.f32 %v908, %v779
    %v927 = vadd.f32 %v925, %v926
    %929 = vrot.lane.b32.xlu0 %v868, 96
    %v930 = vpop.permute.xlu0 %929
    %v931 = vsel %vm130, %v930, 0
    %933 = vmatpush.msra.mxu0 0.0
    %934 = vmatpush.msra.mxu0 0.0
    %935 = vmatpush.msra.mxu0 0.0
    %936 = vmatpush.msra.mxu0 0.0
    %937 = vmatpush.msra.mxu0 0.0
    %938 = vmatpush.msra.mxu0 0.0
    %939 = vmatpush.msra.mxu0 0.0
    %940 = vmatpush.msra.mxu0 0.0
    %941 = vmatpush.msra.mxu0 0.0
    %942 = vmatpush.msra.mxu0 0.0
    %943 = vmatpush.msra.mxu0 0.0
    %944 = vmatpush.msra.mxu0 0.0
    %945 = vmatpush.msra.mxu0 %v39
    %946 = vmatpush.msra.mxu0 %v38
    %947 = vmatpush.msra.mxu0 %v37
    %948 = vmatpush.msra.mxu0 %v36
    %949 = vmatmul.f32.gmra.mxu0 %v931
    %v950 = vpop.f32.mrf.mxu0
    %v951 = vadd.f32 0.0, %v950
    %952 = vdwg.mxu0
    %954 = vrot.lane.b32.xlu0 %v927, 96
    %v955 = vpop.permute.xlu0 %954
    %v956 = vsel %vm130, %v955, 0
    %958 = vmatpush.msra.mxu0 0.0
    %959 = vmatpush.msra.mxu0 0.0
    %960 = vmatpush.msra.mxu0 0.0
    %961 = vmatpush.msra.mxu0 0.0
    %962 = vmatpush.msra.mxu0 0.0
    %963 = vmatpush.msra.mxu0 0.0
    %964 = vmatpush.msra.mxu0 0.0
    %965 = vmatpush.msra.mxu0 0.0
    %966 = vmatpush.msra.mxu0 0.0
    %967 = vmatpush.msra.mxu0 0.0
    %968 = vmatpush.msra.mxu0 0.0
    %969 = vmatpush.msra.mxu0 0.0
    %970 = vmatpush.msra.mxu0 %v35
    %971 = vmatpush.msra.mxu0 %v34
    %972 = vmatpush.msra.mxu0 %v33
    %973 = vmatpush.msra.mxu0 %v32
    %974 = vmatmul.f32.gmra.mxu0 %v956
    %v975 = vpop.f32.mrf.mxu0
    %v976 = vadd.f32 %v951, %v975
    %977 = vdwg.mxu0
    %v978 = vadd.f32 %v976, %v47
    %v979 = vxor.u32 %v978, 2147483648
    %v980 = vmul.f32 %v979, 1.442695
    %v981 = vpow.pop %v980
    %v982 = vadd.f32 %v981, 1.0
    %v983 = vrcp.pop %v982
    %v984 = vmul.f32 %v982, %v983
    %v985 = vsub.f32 1.0, %v984
    %v986 = vmul.f32 %v983, %v985
    %v987 = vadd.f32 %v983, %v986
    %vm988 = vweird.f32 %v982
    %vm989 = vweird.f32 %v983
    %vm990 = vmor %vm988, %vm989
    %v991 = vsel %vm990, %v983, %v987
    %v992 = vand.u32 2147483647, %v982
    %vm993 = vcmp.eq.f32.partialorder %v992, 8.507059e+37
    %v994 = vand.u32 %v982, 2147483648
    %v995 = vor.u32 1.1754944e-38, %v994
    %v996 = vsel %vm993, %v995, %v991
    %v997 = vmul.f32 1.0, %v996
    %999 = vrot.lane.b32.xlu0 %v978, 32
    %v1000 = vpop.permute.xlu0 %999
    %v1002 = vmul.f32 %v997, %v1000
    %1004 = vrot.lane.b32.xlu0 %v1002, 64
    %v1005 = vpop.permute.xlu0 %1004
    %v1007 = vadd.f32 %v978, %v1005
    %v1008 = vtanh.pop %v1007
    %v1009 = vsub.f32 1.0, %v997
    %1011 = vrot.lane.b32.xlu0 %v1008, 96
    %v1012 = vpop.permute.xlu0 %1011
    %v1014 = vmul.f32 %v1009, %v1012
    %v1015 = vmul.f32 %v997, %v868
    %v1016 = vadd.f32 %v1014, %v1015
    %1017 = vmatpush.msra.mxu0 0.0
    %1018 = vmatpush.msra.mxu0 0.0
    %1019 = vmatpush.msra.mxu0 0.0
    %1020 = vmatpush.msra.mxu0 0.0
    %1021 = vmatpush.msra.mxu0 0.0
    %1022 = vmatpush.msra.mxu0 0.0
    %1023 = vmatpush.msra.mxu0 0.0
    %1024 = vmatpush.msra.mxu0 0.0
    %1025 = vmatpush.msra.mxu0 0.0
    %1026 = vmatpush.msra.mxu0 0.0
    %1027 = vmatpush.msra.mxu0 0.0
    %1028 = vmatpush.msra.mxu0 0.0
    %1029 = vmatpush.msra.mxu0 %v31
    %1030 = vmatpush.msra.mxu0 %v30
    %1031 = vmatpush.msra.mxu0 %v29
    %1032 = vmatpush.msra.mxu0 %v28
    %1033 = vmatmul.f32.gmra.mxu0 %v956
    %v1034 = vpop.f32.mrf.mxu0
    %v1035 = vadd.f32 %v45, %v1034
    %1036 = vdwg.mxu0
    %v1037 = vadd.f32 %v119, %v1035
    %v1038 = vxor.u32 %v1037, 2147483648
    %v1039 = vmul.f32 %v1038, 1.442695
    %v1040 = vpow.pop %v1039
    %v1041 = vadd.f32 %v1040, 1.0
    %v1042 = vrcp.pop %v1041
    %v1043 = vmul.f32 %v1041, %v1042
    %v1044 = vsub.f32 1.0, %v1043
    %v1045 = vmul.f32 %v1042, %v1044
    %v1046 = vadd.f32 %v1042, %v1045
    %vm1047 = vweird.f32 %v1041
    %vm1048 = vweird.f32 %v1042
    %vm1049 = vmor %vm1047, %vm1048
    %v1050 = vsel %vm1049, %v1042, %v1046
    %v1051 = vand.u32 2147483647, %v1041
    %vm1052 = vcmp.eq.f32.partialorder %v1051, 8.507059e+37
    %v1053 = vand.u32 %v1041, 2147483648
    %v1054 = vor.u32 1.1754944e-38, %v1053
    %v1055 = vsel %vm1052, %v1054, %v1050
    %v1056 = vmul.f32 1.0, %v1055
    %1058 = vrot.lane.b32.xlu0 %v1035, 64
    %v1059 = vpop.permute.xlu0 %1058
    %v1061 = vmul.f32 %v1056, %v1059
    %1063 = vrot.lane.b32.xlu0 %v1061, 64
    %v1064 = vpop.permute.xlu0 %1063
    %v1066 = vadd.f32 %v119, %v1064
    %v1067 = vtanh.pop %v1066
    %v1068 = vsub.f32 1.0, %v1056
    %1070 = vrot.lane.b32.xlu0 %v1067, 96
    %v1071 = vpop.permute.xlu0 %1070
    %v1073 = vmul.f32 %v1068, %v1071
    %v1074 = vmul.f32 %v1056, %v927
    %v1075 = vadd.f32 %v1073, %v1074
    %1077 = vrot.lane.b32.xlu0 %v1016, 96
    %v1078 = vpop.permute.xlu0 %1077
    %v1079 = vsel %vm130, %v1078, 0
    %1081 = vmatpush.msra.mxu0 0.0
    %1082 = vmatpush.msra.mxu0 0.0
    %1083 = vmatpush.msra.mxu0 0.0
    %1084 = vmatpush.msra.mxu0 0.0
    %1085 = vmatpush.msra.mxu0 0.0
    %1086 = vmatpush.msra.mxu0 0.0
    %1087 = vmatpush.msra.mxu0 0.0
    %1088 = vmatpush.msra.mxu0 0.0
    %1089 = vmatpush.msra.mxu0 0.0
    %1090 = vmatpush.msra.mxu0 0.0
    %1091 = vmatpush.msra.mxu0 0.0
    %1092 = vmatpush.msra.mxu0 0.0
    %1093 = vmatpush.msra.mxu0 %v39
    %1094 = vmatpush.msra.mxu0 %v38
    %1095 = vmatpush.msra.mxu0 %v37
    %1096 = vmatpush.msra.mxu0 %v36
    %1097 = vmatmul.f32.gmra.mxu0 %v1079
    %v1098 = vpop.f32.mrf.mxu0
    %v1099 = vadd.f32 0.0, %v1098
    %1100 = vdwg.mxu0
    %1102 = vrot.lane.b32.xlu0 %v1075, 96
    %v1103 = vpop.permute.xlu0 %1102
    %v1104 = vsel %vm130, %v1103, 0
    %1106 = vmatpush.msra.mxu0 0.0
    %1107 = vmatpush.msra.mxu0 0.0
    %1108 = vmatpush.msra.mxu0 0.0
    %1109 = vmatpush.msra.mxu0 0.0
    %1110 = vmatpush.msra.mxu0 0.0
    %1111 = vmatpush.msra.mxu0 0.0
    %1112 = vmatpush.msra.mxu0 0.0
    %1113 = vmatpush.msra.mxu0 0.0
    %1114 = vmatpush.msra.mxu0 0.0
    %1115 = vmatpush.msra.mxu0 0.0
    %1116 = vmatpush.msra.mxu0 0.0
    %1117 = vmatpush.msra.mxu0 0.0
    %1118 = vmatpush.msra.mxu0 %v35
    %1119 = vmatpush.msra.mxu0 %v34
    %1120 = vmatpush.msra.mxu0 %v33
    %1121 = vmatpush.msra.mxu0 %v32
    %1122 = vmatmul.f32.gmra.mxu0 %v1104
    %v1123 = vpop.f32.mrf.mxu0
    %v1124 = vadd.f32 %v1099, %v1123
    %1125 = vdwg.mxu0
    %v1126 = vadd.f32 %v1124, %v47
    %v1127 = vxor.u32 %v1126, 2147483648
    %v1128 = vmul.f32 %v1127, 1.442695
    %v1129 = vpow.pop %v1128
    %v1130 = vadd.f32 %v1129, 1.0
    %v1131 = vrcp.pop %v1130
    %v1132 = vmul.f32 %v1130, %v1131
    %v1133 = vsub.f32 1.0, %v1132
    %v1134 = vmul.f32 %v1131, %v1133
    %v1135 = vadd.f32 %v1131, %v1134
    %vm1136 = vweird.f32 %v1130
    %vm1137 = vweird.f32 %v1131
    %vm1138 = vmor %vm1136, %vm1137
    %v1139 = vsel %vm1138, %v1131, %v1135
    %v1140 = vand.u32 2147483647, %v1130
    %vm1141 = vcmp.eq.f32.partialorder %v1140, 8.507059e+37
    %v1142 = vand.u32 %v1130, 2147483648
    %v1143 = vor.u32 1.1754944e-38, %v1142
    %v1144 = vsel %vm1141, %v1143, %v1139
    %v1145 = vmul.f32 1.0, %v1144
    %1147 = vrot.lane.b32.xlu0 %v1126, 32
    %v1148 = vpop.permute.xlu0 %1147
    %v1150 = vmul.f32 %v1145, %v1148
    %1152 = vrot.lane.b32.xlu0 %v1150, 64
    %v1153 = vpop.permute.xlu0 %1152
    %v1155 = vadd.f32 %v1126, %v1153
    %v1156 = vtanh.pop %v1155
    %v1157 = vsub.f32 1.0, %v1145
    %1159 = vrot.lane.b32.xlu0 %v1156, 96
    %v1160 = vpop.permute.xlu0 %1159
    %v1162 = vmul.f32 %v1157, %v1160
    %v1163 = vmul.f32 %v1145, %v1016
    %v1164 = vadd.f32 %v1162, %v1163
    %1165 = vmatpush.msra.mxu0 0.0
    %1166 = vmatpush.msra.mxu0 0.0
    %1167 = vmatpush.msra.mxu0 0.0
    %1168 = vmatpush.msra.mxu0 0.0
    %1169 = vmatpush.msra.mxu0 0.0
    %1170 = vmatpush.msra.mxu0 0.0
    %1171 = vmatpush.msra.mxu0 0.0
    %1172 = vmatpush.msra.mxu0 0.0
    %1173 = vmatpush.msra.mxu0 0.0
    %1174 = vmatpush.msra.mxu0 0.0
    %1175 = vmatpush.msra.mxu0 0.0
    %1176 = vmatpush.msra.mxu0 0.0
    %1177 = vmatpush.msra.mxu0 %v31
    %1178 = vmatpush.msra.mxu0 %v30
    %1179 = vmatpush.msra.mxu0 %v29
    %1180 = vmatpush.msra.mxu0 %v28
    %1181 = vmatmul.f32.gmra.mxu0 %v1104
    %v1182 = vpop.f32.mrf.mxu0
    %v1183 = vadd.f32 %v45, %v1182
    %1184 = vdwg.mxu0
    %v1185 = vadd.f32 %v129, %v1183
    %v1186 = vxor.u32 %v1185, 2147483648
    %v1187 = vmul.f32 %v1186, 1.442695
    %v1188 = vpow.pop %v1187
    %v1189 = vadd.f32 %v1188, 1.0
    %v1190 = vrcp.pop %v1189
    %v1191 = vmul.f32 %v1189, %v1190
    %v1192 = vsub.f32 1.0, %v1191
    %v1193 = vmul.f32 %v1190, %v1192
    %v1194 = vadd.f32 %v1190, %v1193
    %vm1195 = vweird.f32 %v1189
    %vm1196 = vweird.f32 %v1190
    %vm1197 = vmor %vm1195, %vm1196
    %v1198 = vsel %vm1197, %v1190, %v1194
    %v1199 = vand.u32 2147483647, %v1189
    %vm1200 = vcmp.eq.f32.partialorder %v1199, 8.507059e+37
    %v1201 = vand.u32 %v1189, 2147483648
    %v1202 = vor.u32 1.1754944e-38, %v1201
    %v1203 = vsel %vm1200, %v1202, %v1198
    %v1204 = vmul.f32 1.0, %v1203
    %1206 = vrot.lane.b32.xlu0 %v1183, 64
    %v1207 = vpop.permute.xlu0 %1206
    %v1209 = vmul.f32 %v1204, %v1207
    %1211 = vrot.lane.b32.xlu0 %v1209, 64
    %v1212 = vpop.permute.xlu0 %1211
    %v1214 = vadd.f32 %v129, %v1212
    %v1215 = vtanh.pop %v1214
    %v1216 = vsub.f32 1.0, %v1204
    %1218 = vrot.lane.b32.xlu0 %v1215, 96
    %v1219 = vpop.permute.xlu0 %1218
    %v1221 = vmul.f32 %v1216, %v1219
    %v1222 = vmul.f32 %v1204, %v1075
    %v1223 = vadd.f32 %v1221, %v1222
    %1225 = vrot.lane.b32.xlu0 %v1164, 96
    %v1226 = vpop.permute.xlu0 %1225
    %v1227 = vsel %vm130, %v1226, 0
    %1229 = vmatpush.msra.mxu0 0.0
    %1230 = vmatpush.msra.mxu0 0.0
    %1231 = vmatpush.msra.mxu0 0.0
    %1232 = vmatpush.msra.mxu0 0.0
    %1233 = vmatpush.msra.mxu0 0.0
    %1234 = vmatpush.msra.mxu0 0.0
    %1235 = vmatpush.msra.mxu0 0.0
    %1236 = vmatpush.msra.mxu0 0.0
    %1237 = vmatpush.msra.mxu0 0.0
    %1238 = vmatpush.msra.mxu0 0.0
    %1239 = vmatpush.msra.mxu0 0.0
    %1240 = vmatpush.msra.mxu0 0.0
    %1241 = vmatpush.msra.mxu0 %v39
    %1242 = vmatpush.msra.mxu0 %v38
    %1243 = vmatpush.msra.mxu0 %v37
    %1244 = vmatpush.msra.mxu0 %v36
    %1245 = vmatmul.f32.gmra.mxu0 %v1227
    %v1246 = vpop.f32.mrf.mxu0
    %v1247 = vadd.f32 0.0, %v1246
    %1248 = vdwg.mxu0
    %1250 = vrot.lane.b32.xlu0 %v1223, 96
    %v1251 = vpop.permute.xlu0 %1250
    %v1252 = vsel %vm130, %v1251, 0
    %1254 = vmatpush.msra.mxu0 0.0
    %1255 = vmatpush.msra.mxu0 0.0
    %1256 = vmatpush.msra.mxu0 0.0
    %1257 = vmatpush.msra.mxu0 0.0
    %1258 = vmatpush.msra.mxu0 0.0
    %1259 = vmatpush.msra.mxu0 0.0
    %1260 = vmatpush.msra.mxu0 0.0
    %1261 = vmatpush.msra.mxu0 0.0
    %1262 = vmatpush.msra.mxu0 0.0
    %1263 = vmatpush.msra.mxu0 0.0
    %1264 = vmatpush.msra.mxu0 0.0
    %1265 = vmatpush.msra.mxu0 0.0
    %1266 = vmatpush.msra.mxu0 %v35
    %1267 = vmatpush.msra.mxu0 %v34
    %1268 = vmatpush.msra.mxu0 %v33
    %1269 = vmatpush.msra.mxu0 %v32
    %1270 = vmatmul.f32.gmra.mxu0 %v1252
    %v1271 = vpop.f32.mrf.mxu0
    %v1272 = vadd.f32 %v1247, %v1271
    %1273 = vdwg.mxu0
    %v1274 = vadd.f32 %v1272, %v47
    %v1275 = vxor.u32 %v1274, 2147483648
    %v1276 = vmul.f32 %v1275, 1.442695
    %v1277 = vpow.pop %v1276
    %v1278 = vadd.f32 %v1277, 1.0
    %v1279 = vrcp.pop %v1278
    %v1280 = vmul.f32 %v1278, %v1279
    %v1281 = vsub.f32 1.0, %v1280
    %v1282 = vmul.f32 %v1279, %v1281
    %v1283 = vadd.f32 %v1279, %v1282
    %vm1284 = vweird.f32 %v1278
    %vm1285 = vweird.f32 %v1279
    %vm1286 = vmor %vm1284, %vm1285
    %v1287 = vsel %vm1286, %v1279, %v1283
    %v1288 = vand.u32 2147483647, %v1278
    %vm1289 = vcmp.eq.f32.partialorder %v1288, 8.507059e+37
    %v1290 = vand.u32 %v1278, 2147483648
    %v1291 = vor.u32 1.1754944e-38, %v1290
    %v1292 = vsel %vm1289, %v1291, %v1287
    %v1293 = vmul.f32 1.0, %v1292
    %1295 = vrot.lane.b32.xlu0 %v1274, 32
    %v1296 = vpop.permute.xlu0 %1295
    %v1298 = vmul.f32 %v1293, %v1296
    %1300 = vrot.lane.b32.xlu0 %v1298, 64
    %v1301 = vpop.permute.xlu0 %1300
    %v1303 = vadd.f32 %v1274, %v1301
    %v1304 = vtanh.pop %v1303
    %v1305 = vsub.f32 1.0, %v1293
    %1307 = vrot.lane.b32.xlu0 %v1304, 96
    %v1308 = vpop.permute.xlu0 %1307
    %v1310 = vmul.f32 %v1305, %v1308
    %v1311 = vmul.f32 %v1293, %v1164
    %v1312 = vadd.f32 %v1310, %v1311
    %v1313 = vperm.slane %v48, 0
    %1315 = vrot.lane.b32.xlu0 %v1312, 96
    %v1316 = vpop.permute.xlu0 %1315
    %v1317 = vsel %vm130, %v1316, 0
    %1319 = vmatpush.msra.mxu0 0.0
    %1320 = vmatpush.msra.mxu0 0.0
    %1321 = vmatpush.msra.mxu0 0.0
    %1322 = vmatpush.msra.mxu0 0.0
    %1323 = vmatpush.msra.mxu0 0.0
    %1324 = vmatpush.msra.mxu0 0.0
    %1325 = vmatpush.msra.mxu0 0.0
    %1326 = vmatpush.msra.mxu0 0.0
    %1327 = vmatpush.msra.mxu0 0.0
    %1328 = vmatpush.msra.mxu0 0.0
    %1329 = vmatpush.msra.mxu0 0.0
    %1330 = vmatpush.msra.mxu0 0.0
    %1331 = vmatpush.msra.mxu0 %v43
    %1332 = vmatpush.msra.mxu0 %v42
    %1333 = vmatpush.msra.mxu0 %v41
    %1334 = vmatpush.msra.mxu0 %v40
    %1335 = vmatmul.f32.gmra.mxu0 %v1317
    %v1336 = vpop.f32.mrf.mxu0
    %v1337 = vadd.f32 %v1313, %v1336
    %1338 = vdwg.mxu0
    %v1339 = vmax.f32 %v1337, 0.0
    %vm1340 = vcmask 58368
    %1341 = vst.msk [vmem:[#allocation5] sm:$0x3] %vm1340, %v1339
    // Predicated region
    $region18: #{idraggn_forward.1} parent=1 // pred_check
      _
    $region19: #{idraggn_forward.1} parent=1 // pred_check_branch
      %1343 = sbr.rel (0) target = $region21
    $region20: #{idraggn_forward.1} parent=1 // pred_region
      %1345 = vsyncadd [#allocation3], 0
      %s1347 = sshll.u32 [#allocation5], 4
      %s1348 = int_to_ptr.vmem [resolvable:$true] %s1347
      %s1349 = sshll.u32 %s3, 4
      %s1350 = int_to_ptr.hbm [resolvable:$true] %s1349
      %1352 = dma.vmem_to_hbm [thread:$0]  %s1348, 32, %s1350, [#allocation3]
    $region21: #{idraggn_forward.1} parent=1 // pred_fallthru
      _
    // Predicated region
    $region22: #{idraggn_forward.1} parent=1 // pred_check
      _
    $region23: #{idraggn_forward.1} parent=1 // pred_check_branch
      %1354 = sbr.rel (0) target = $region25
    $region24: #{idraggn_forward.1} parent=1 // pred_region
      %1356 = dma.done [#allocation3], 32
    $region25: #{idraggn_forward.1} parent=1 // pred_fallthru
      _
    %1357 = vsyncpa [#allocation3], 1
    %1358 = vsyncpa [#allocation4], 1

</llo_original>
